<compile_context>
chip_gen: v7x
topology: tpu7x:2x2x1
jax: 0.10.0
libtpu: 0.0.40
codegen_flags: <defaults>
</compile_context>

<pallas_src>
import functools

import jax
import jax.numpy as jnp
from jax import lax
from jax.experimental import pallas as pl
from jax.experimental.pallas import tpu as pltpu


# ---------------------------------------------------------------------------
# Fused Rep_Inception kernel.  One (1, H, W, c_tile) slab per grid step.
#
#   out = sx*x + bias                            (identity + dw 1x1 + BN folds)
#       + sum_k tap_h[k] * shiftH(x, k-pad)      (dwconv_w branch, conv along H)
#       + sum_k tap_w[k] * shiftW(x, k-pad)      (dwconv_h branch, conv along W)
#
# Channel blocks entirely inside one branch skip the other branch's taps.
# ---------------------------------------------------------------------------
def _rep_inception_kernel(x_ref, taph_ref, tapw_ref, sx_ref, bias_ref, o_ref,
                          xpad_ref, acc_ref, *, K, h_block_limit, w_block_start):
    pad = K // 2
    _, H, W, Ct = x_ref.shape
    cb = pl.program_id(1)

    x = x_ref[0].astype(jnp.float32)                          # (H, W, Ct)
    # identity + depthwise 1x1 conv + both BNs folded into one FMA (hoisted bcast)
    acc_ref[...] = (x * sx_ref[...].astype(jnp.float32)
                    + bias_ref[...].astype(jnp.float32))

    # ---- dwconv_w branch: depthwise (K,1) kernel -> conv along H ----------
    @pl.when(cb < h_block_limit)
    def _():
        taph = taph_ref[...].astype(jnp.float32)              # (K, Ct)
        # zero-bordered copy of x along H, written once per grid step
        if pad > 0:
            zrow = jnp.zeros((pad, W, Ct), jnp.float32)
            xpad_ref[pl.ds(0, pad)] = zrow
            xpad_ref[pl.ds(pad + H, pad)] = zrow
        xpad_ref[pl.ds(pad, H)] = x
        acc = acc_ref[...]
        for k in range(K):
            if k == pad:
                acc = acc + taph[k] * x                       # centre tap from registers
            else:
                acc = acc + taph[k] * xpad_ref[pl.ds(k, H)]   # shifted slab load -> FMA
        acc_ref[...] = acc

    # ---- dwconv_h branch: depthwise (1,K) kernel -> conv along W ----------
    @pl.when(cb >= w_block_start)
    def _():
        tapw = tapw_ref[...].astype(jnp.float32)              # (K, Ct)
        col = lax.broadcasted_iota(jnp.int32, (W, 1), 0)      # hoisted out of tap loop
        acc = acc_ref[...]
        for k in range(K):
            d = k - pad
            if d == 0:
                acc = acc + tapw[k] * x
            else:
                rolled = pltpu.roll(x, shift=(-d) % W, axis=1)   # XLU sublane rotate
                # fold the zero-pad boundary mask into a (W, Ct) tap coefficient
                valid = (col >= max(0, -d)) & (col < W - max(0, d))
                coef = tapw[k] * valid.astype(jnp.float32)
                acc = acc + coef * rolled                        # one FMA per tap
        acc_ref[...] = acc

    o_ref[0] = acc_ref[...].astype(o_ref.dtype)


# ---------------------------------------------------------------------------
# Parameter init (deterministic; mirrors the module's structure, BN folded to
# per-channel scale/bias as in inference / fuse()).
# ---------------------------------------------------------------------------
def init_repdw_params(key, ed, K):
    ks = jax.random.split(key, 6)
    conv_w = jax.random.normal(ks[0], (ed, K), jnp.float32) * 0.02  # axial dw taps
    w1 = jax.random.normal(ks[1], (ed,), jnp.float32) * 0.02        # dw 1x1 weight
    b1 = jax.random.normal(ks[2], (ed,), jnp.float32) * 0.05        # conv1 bias
    # Conv2d_BN's BN and the outer BatchNorm2d in inference mode, folded to
    # per-channel scale/bias (randomized to stand in for real running stats).
    s1 = 1.0 + 0.1 * jax.random.normal(ks[3], (ed,), jnp.float32)
    b1bn = 0.1 * jax.random.normal(ks[4], (ed,), jnp.float32)
    s2 = 1.0 + 0.1 * jax.random.normal(ks[5], (ed,), jnp.float32)
    b2 = 0.1 * jax.random.normal(jax.random.fold_in(key, 7), (ed,), jnp.float32)
    return dict(conv_w=conv_w, s1=s1, b1bn=b1bn, w1=w1, b1=b1, s2=s2, b2=b2)


def _fold_repdw(p):
    """out = s2*(s1*conv + b1bn + w1*x + b1 + x) + b2
           = (s2*s1)*conv + s2*(w1+1)*x + (s2*(b1bn+b1) + b2)"""
    taps = p["conv_w"] * (p["s2"] * p["s1"])[:, None]        # (ed, K)
    sx = p["s2"] * (p["w1"] + 1.0)                           # (ed,)
    bias = p["s2"] * (p["b1bn"] + p["b1"]) + p["b2"]         # (ed,)
    return taps, sx, bias


# ---------------------------------------------------------------------------
# Rep_Inception forward, NHWC (preferred entry point: no layout transposes).
# ---------------------------------------------------------------------------
def rep_inception_nhwc(x, params_w, params_h, *, gc, K):
    B, H, W, dim = x.shape
    cw = dim - gc
    pad = K // 2
    assert K % 2 == 1
    assert params_w["conv_w"].shape == (cw, K)
    assert params_h["conv_w"].shape == (gc, K)

    taps_w, sx_w, bias_w = _fold_repdw(params_w)   # channels [0, cw): conv along H
    taps_h, sx_h, bias_h = _fold_repdw(params_h)   # channels [cw, dim): conv along W

    tap_h_axis = jnp.concatenate([taps_w, jnp.zeros((gc, K), jnp.float32)], axis=0).T
    tap_w_axis = jnp.concatenate([jnp.zeros((cw, K), jnp.float32), taps_h], axis=0).T
    sx = jnp.concatenate([sx_w, sx_h])[None, :]                 # (1, dim)
    bias = jnp.concatenate([bias_w, bias_h])[None, :]           # (1, dim)

    # ---- channel tile: lane-dense (128) when possible, VMEM-bounded -------
    c_tile = 128 if dim >= 128 else dim
    itemsize = jnp.dtype(x.dtype).itemsize
    vmem_budget = 24 * 1024 * 1024

    def vmem_est(ct):
        slab = H * W * ct
        return (slab * itemsize * 4                  # x + out blocks, double-buffered
                + slab * 4                           # f32 accumulator scratch
                + (H + 2 * pad) * W * ct * 4)        # zero-bordered f32 scratch

    while vmem_est(c_tile) > vmem_budget and c_tile > 8 and c_tile % 2 == 0:
        c_tile //= 2
    # TODO(synk): for very large H*W also tile H with a K//2 halo (manual DMA of
    # tile+halo rows) instead of only shrinking c_tile; also gives v7x's two
    # TensorCores more parallel grid steps when B is small.

    C = -(-dim // c_tile) * c_tile
    if C != dim:   # pad channels up to a multiple of c_tile (zero taps/scale/bias)
        padc = C - dim
        x = jnp.pad(x, ((0, 0), (0, 0), (0, 0), (0, padc)))
        tap_h_axis = jnp.pad(tap_h_axis, ((0, 0), (0, padc)))
        tap_w_axis = jnp.pad(tap_w_axis, ((0, 0), (0, padc)))
        sx = jnp.pad(sx, ((0, 0), (0, padc)))
        bias = jnp.pad(bias, ((0, 0), (0, padc)))

    n_cb = C // c_tile
    h_block_limit = -(-cw // c_tile)   # blocks cb <  this contain dwconv_w channels
    w_block_start = cw // c_tile       # blocks cb >= this contain dwconv_h channels

    kernel = functools.partial(_rep_inception_kernel, K=K,
                               h_block_limit=h_block_limit,
                               w_block_start=w_block_start)

    out = pl.pallas_call(
        kernel,
        out_shape=jax.ShapeDtypeStruct((B, H, W, C), x.dtype),
        grid=(B, n_cb),
        in_specs=[
            pl.BlockSpec((1, H, W, c_tile), lambda b, cb: (b, 0, 0, cb)),
            pl.BlockSpec((K, c_tile), lambda b, cb: (0, cb)),
            pl.BlockSpec((K, c_tile), lambda b, cb: (0, cb)),
            pl.BlockSpec((1, c_tile), lambda b, cb: (0, cb)),
            pl.BlockSpec((1, c_tile), lambda b, cb: (0, cb)),
        ],
        out_specs=pl.BlockSpec((1, H, W, c_tile), lambda b, cb: (b, 0, 0, cb)),
        scratch_shapes=[
            pltpu.VMEM((H + 2 * pad, W, c_tile), jnp.float32),   # zero-bordered x
            pltpu.VMEM((H, W, c_tile), jnp.float32),             # f32 accumulator
        ],
        compiler_params=pltpu.CompilerParams(
            dimension_semantics=("parallel", "parallel"),
            vmem_limit_bytes=48 * 1024 * 1024),
    )(x, tap_h_axis, tap_w_axis, sx, bias)

    if C != dim:
        out = out[..., :dim]
    return out


def rep_inception(x, params_w, params_h, *, gc, K):
    """NCHW drop-in wrapper (PyTorch layout parity).  In a fused NHWC network
    call rep_inception_nhwc directly and skip both HBM transposes."""
    x_nhwc = jnp.transpose(x, (0, 2, 3, 1))
    y = rep_inception_nhwc(x_nhwc, params_w, params_h, gc=gc, K=K)
    return jnp.transpose(y, (0, 3, 1, 2))


# ---------------------------------------------------------------------------
# Pure-JAX reference (unfused, NCHW) for correctness checks
# ---------------------------------------------------------------------------
def _ref_repdw(x, p, conv_axis, K):
    B, C, H, W = x.shape
    pad = K // 2
    bc = lambda v: v[None, :, None, None]
    if conv_axis == 3:   # (1,K) kernel: conv along W
        xp = jnp.pad(x, ((0, 0), (0, 0), (0, 0), (pad, pad)))
        conv = sum(bc(p["conv_w"][:, k]) * xp[:, :, :, k:k + W] for k in range(K))
    else:                # (K,1) kernel: conv along H
        xp = jnp.pad(x, ((0, 0), (0, 0), (pad, pad), (0, 0)))
        conv = sum(bc(p["conv_w"][:, k]) * xp[:, :, k:k + H, :] for k in range(K))
    inner = bc(p["s1"]) * conv + bc(p["b1bn"]) + bc(p["w1"]) * x + bc(p["b1"]) + x
    return bc(p["s2"]) * inner + bc(p["b2"])


def _ref_rep_inception(x, params_w, params_h, gc, K):
    dim = x.shape[1]
    y_w = _ref_repdw(x[:, : dim - gc], params_w, 2, K)   # dwconv_w: (K,1) kernel
    y_h = _ref_repdw(x[:, dim - gc:], params_h, 3, K)    # dwconv_h: (1,K) kernel
    return jnp.concatenate([y_w, y_h], axis=1)


if __name__ == "__main__":
    K = 7                                   # kernel_max
    key = jax.random.PRNGKey(0)

    cases = [
        # (B, dim, H, W, ratio, dtype, tol)
        (2, 8, 16, 16, 0.5, jnp.float32, 1e-5),    # mixed channel block (dim < 128)
        (1, 256, 8, 8, 0.5, jnp.float32, 1e-5),    # pure-branch 128-lane blocks (gating)
        (1, 192, 8, 8, 0.5, jnp.float32, 1e-5),    # channel padding up to a 128 multiple
        (2, 8, 16, 16, 0.5, jnp.bfloat16, 5e-2),   # bf16 HBM I/O, f32 accumulation
    ]

    for i, (B, dim, H, W, ratio, dtype, tol) in enumerate(cases):
        key, kx, kw, kh = jax.random.split(key, 4)
        gc = int(dim * ratio)
        x = jax.random.normal(kx, (B, dim, H, W), jnp.float32).astype(dtype)
        params_w = init_repdw_params(kw, dim - gc, K)   # dwconv_w: (K,1), conv along H
        params_h = init_repdw_params(kh, gc, K)         # dwconv_h: (1,K), conv along W

        out = jax.block_until_ready(rep_inception(x, params_w, params_h, gc=gc, K=K))
        ref = _ref_rep_inception(x.astype(jnp.float32), params_w, params_h, gc, K)

        assert out.shape == (B, dim, H, W), f"case {i}: bad shape {out.shape}"
        err = float(jnp.max(jnp.abs(out.astype(jnp.float32) - ref)))
        assert jnp.allclose(out.astype(jnp.float32), ref, atol=tol, rtol=tol), (
            f"case {i}: mismatch vs reference (max abs err {err})")

    print("KERNEL_OK")
</pallas_src>

<mosaic_0001>
module attributes {stable_mosaic.version = 11 : i64} {
  func.func @_rep_inception_kernel(%arg0: i32, %arg1: i32, %arg2: memref<1x16x16x8xf32, #tpu.memory_space<vmem>>, %arg3: memref<7x8xf32, #tpu.memory_space<vmem>>, %arg4: memref<7x8xf32, #tpu.memory_space<vmem>>, %arg5: memref<1x8xf32, #tpu.memory_space<vmem>>, %arg6: memref<1x8xf32, #tpu.memory_space<vmem>>, %arg7: memref<1x16x16x8xf32, #tpu.memory_space<vmem>>, %arg8: memref<22x16x8xf32, #tpu.memory_space<vmem>>, %arg9: memref<16x16x8xf32, #tpu.memory_space<vmem>>) attributes {dimension_semantics = [#tpu.dimension_semantics<parallel>, #tpu.dimension_semantics<parallel>], iteration_bounds = array<i64: 2, 1>, scalar_prefetch = 0 : i64, scratch_operands = 2 : i64, tpu.core_type = #tpu.core_type<tc>, window_params = [{transform_indices = @transform_0, window_bounds = array<i64: 1, 16, 16, 8>}, {transform_indices = @transform_1, window_bounds = array<i64: 7, 8>}, {transform_indices = @transform_2, window_bounds = array<i64: 7, 8>}, {transform_indices = @transform_3, window_bounds = array<i64: 1, 8>}, {transform_indices = @transform_4, window_bounds = array<i64: 1, 8>}, {transform_indices = @transform_5, window_bounds = array<i64: 1, 16, 16, 8>}]} {
    %c0 = arith.constant 0 : index
    %c0_0 = arith.constant 0 : index
    %c0_1 = arith.constant 0 : index
    %c0_2 = arith.constant 0 : index
    %0 = vector.load %arg2[%c0, %c0_0, %c0_1, %c0_2] : memref<1x16x16x8xf32, #tpu.memory_space<vmem>>, vector<1x16x16x8xf32>
    %1 = vector.shape_cast %0 : vector<1x16x16x8xf32> to vector<16x16x8xf32>
    %c0_3 = arith.constant 0 : index
    %c0_4 = arith.constant 0 : index
    %2 = vector.load %arg5[%c0_3, %c0_4] : memref<1x8xf32, #tpu.memory_space<vmem>>, vector<1x8xf32>
    %3 = vector.shape_cast %2 : vector<1x8xf32> to vector<1x1x8xf32>
    %4 = vector.broadcast %3 : vector<1x1x8xf32> to vector<16x16x8xf32>
    %5 = arith.mulf %1, %4 : vector<16x16x8xf32>
    %c0_5 = arith.constant 0 : index
    %c0_6 = arith.constant 0 : index
    %6 = vector.load %arg6[%c0_5, %c0_6] : memref<1x8xf32, #tpu.memory_space<vmem>>, vector<1x8xf32>
    %7 = vector.shape_cast %6 : vector<1x8xf32> to vector<1x1x8xf32>
    %8 = vector.broadcast %7 : vector<1x1x8xf32> to vector<16x16x8xf32>
    %9 = arith.addf %5, %8 : vector<16x16x8xf32>
    %c0_7 = arith.constant 0 : index
    %c0_8 = arith.constant 0 : index
    %c0_9 = arith.constant 0 : index
    %10 = vector.load %arg9[%c0_7, %c0_8, %c0_9] : memref<16x16x8xf32, #tpu.memory_space<vmem>>, vector<16x16x8xf32>
    tpu.vector_store %arg9[%c0_7, %c0_8, %c0_9], %9 {strides = array<i32>} : memref<16x16x8xf32, #tpu.memory_space<vmem>>, vector<16x16x8xf32>,
    %c1_i32 = arith.constant 1 : i32
    %11 = arith.cmpi slt, %arg1, %c1_i32 : i32
    %12 = arith.extui %11 : i1 to i32
    %c0_i32 = arith.constant 0 : i32
    %13 = arith.cmpi ne, %12, %c0_i32 : i32
    scf.if %13 {
      %c0_19 = arith.constant 0 : index
      %c0_20 = arith.constant 0 : index
      %21 = vector.load %arg3[%c0_19, %c0_20] : memref<7x8xf32, #tpu.memory_space<vmem>>, vector<7x8xf32>
      %cst = arith.constant 0.000000e+00 : f32
      %22 = vector.broadcast %cst : f32 to vector<3x16x8xf32>
      %c0_21 = arith.constant 0 : index
      %c0_22 = arith.constant 0 : index
      %c0_23 = arith.constant 0 : index
      %23 = vector.load %arg8[%c0_21, %c0_22, %c0_23] : memref<22x16x8xf32, #tpu.memory_space<vmem>>, vector<3x16x8xf32>
      tpu.vector_store %arg8[%c0_21, %c0_22, %c0_23], %22 {strides = array<i32>} : memref<22x16x8xf32, #tpu.memory_space<vmem>>, vector<3x16x8xf32>,
      %c19 = arith.constant 19 : index
      %c0_24 = arith.constant 0 : index
      %c0_25 = arith.constant 0 : index
      %24 = vector.load %arg8[%c19, %c0_24, %c0_25] : memref<22x16x8xf32, #tpu.memory_space<vmem>>, vector<3x16x8xf32>
      tpu.vector_store %arg8[%c19, %c0_24, %c0_25], %22 {strides = array<i32>} : memref<22x16x8xf32, #tpu.memory_space<vmem>>, vector<3x16x8xf32>,
      %c3 = arith.constant 3 : index
      %c0_26 = arith.constant 0 : index
      %c0_27 = arith.constant 0 : index
      %25 = vector.load %arg8[%c3, %c0_26, %c0_27] : memref<22x16x8xf32, #tpu.memory_space<vmem>>, vector<16x16x8xf32>
      tpu.vector_store %arg8[%c3, %c0_26, %c0_27], %1 {strides = array<i32>} : memref<22x16x8xf32, #tpu.memory_space<vmem>>, vector<16x16x8xf32>,
      %c0_28 = arith.constant 0 : index
      %c0_29 = arith.constant 0 : index
      %c0_30 = arith.constant 0 : index
      %26 = vector.load %arg9[%c0_28, %c0_29, %c0_30] : memref<16x16x8xf32, #tpu.memory_space<vmem>>, vector<16x16x8xf32>
      %27 = vector.extract_strided_slice %21 {offsets = [0, 0], sizes = [1, 8], strides = [1, 1]} : vector<7x8xf32> to vector<1x8xf32>
      %28 = vector.shape_cast %27 : vector<1x8xf32> to vector<8xf32>
      %c0_31 = arith.constant 0 : index
      %c0_32 = arith.constant 0 : index
      %c0_33 = arith.constant 0 : index
      %29 = vector.load %arg8[%c0_31, %c0_32, %c0_33] : memref<22x16x8xf32, #tpu.memory_space<vmem>>, vector<16x16x8xf32>
      %30 = vector.shape_cast %28 : vector<8xf32> to vector<1x1x8xf32>
      %31 = vector.broadcast %30 : vector<1x1x8xf32> to vector<16x16x8xf32>
      %32 = arith.mulf %31, %29 : vector<16x16x8xf32>
      %33 = arith.addf %26, %32 : vector<16x16x8xf32>
      %34 = vector.extract_strided_slice %21 {offsets = [1, 0], sizes = [1, 8], strides = [1, 1]} : vector<7x8xf32> to vector<1x8xf32>
      %35 = vector.shape_cast %34 : vector<1x8xf32> to vector<8xf32>
      %c1 = arith.constant 1 : index
      %c0_34 = arith.constant 0 : index
      %c0_35 = arith.constant 0 : index
      %36 = vector.load %arg8[%c1, %c0_34, %c0_35] : memref<22x16x8xf32, #tpu.memory_space<vmem>>, vector<16x16x8xf32>
      %37 = vector.shape_cast %35 : vector<8xf32> to vector<1x1x8xf32>
      %38 = vector.broadcast %37 : vector<1x1x8xf32> to vector<16x16x8xf32>
      %39 = arith.mulf %38, %36 : vector<16x16x8xf32>
      %40 = arith.addf %33, %39 : vector<16x16x8xf32>
      %41 = vector.extract_strided_slice %21 {offsets = [2, 0], sizes = [1, 8], strides = [1, 1]} : vector<7x8xf32> to vector<1x8xf32>
      %42 = vector.shape_cast %41 : vector<1x8xf32> to vector<8xf32>
      %c2 = arith.constant 2 : index
      %c0_36 = arith.constant 0 : index
      %c0_37 = arith.constant 0 : index
      %43 = vector.load %arg8[%c2, %c0_36, %c0_37] : memref<22x16x8xf32, #tpu.memory_space<vmem>>, vector<16x16x8xf32>
      %44 = vector.shape_cast %42 : vector<8xf32> to vector<1x1x8xf32>
      %45 = vector.broadcast %44 : vector<1x1x8xf32> to vector<16x16x8xf32>
      %46 = arith.mulf %45, %43 : vector<16x16x8xf32>
      %47 = arith.addf %40, %46 : vector<16x16x8xf32>
      %48 = vector.extract_strided_slice %21 {offsets = [3, 0], sizes = [1, 8], strides = [1, 1]} : vector<7x8xf32> to vector<1x8xf32>
      %49 = vector.shape_cast %48 : vector<1x8xf32> to vector<8xf32>
      %50 = vector.shape_cast %49 : vector<8xf32> to vector<1x1x8xf32>
      %51 = vector.broadcast %50 : vector<1x1x8xf32> to vector<16x16x8xf32>
      %52 = arith.mulf %51, %1 : vector<16x16x8xf32>
      %53 = arith.addf %47, %52 : vector<16x16x8xf32>
      %54 = vector.extract_strided_slice %21 {offsets = [4, 0], sizes = [1, 8], strides = [1, 1]} : vector<7x8xf32> to vector<1x8xf32>
      %55 = vector.shape_cast %54 : vector<1x8xf32> to vector<8xf32>
      %c4 = arith.constant 4 : index
      %c0_38 = arith.constant 0 : index
      %c0_39 = arith.constant 0 : index
      %56 = vector.load %arg8[%c4, %c0_38, %c0_39] : memref<22x16x8xf32, #tpu.memory_space<vmem>>, vector<16x16x8xf32>
      %57 = vector.shape_cast %55 : vector<8xf32> to vector<1x1x8xf32>
      %58 = vector.broadcast %57 : vector<1x1x8xf32> to vector<16x16x8xf32>
      %59 = arith.mulf %58, %56 : vector<16x16x8xf32>
      %60 = arith.addf %53, %59 : vector<16x16x8xf32>
      %61 = vector.extract_strided_slice %21 {offsets = [5, 0], sizes = [1, 8], strides = [1, 1]} : vector<7x8xf32> to vector<1x8xf32>
      %62 = vector.shape_cast %61 : vector<1x8xf32> to vector<8xf32>
      %c5 = arith.constant 5 : index
      %c0_40 = arith.constant 0 : index
      %c0_41 = arith.constant 0 : index
      %63 = vector.load %arg8[%c5, %c0_40, %c0_41] : memref<22x16x8xf32, #tpu.memory_space<vmem>>, vector<16x16x8xf32>
      %64 = vector.shape_cast %62 : vector<8xf32> to vector<1x1x8xf32>
      %65 = vector.broadcast %64 : vector<1x1x8xf32> to vector<16x16x8xf32>
      %66 = arith.mulf %65, %63 : vector<16x16x8xf32>
      %67 = arith.addf %60, %66 : vector<16x16x8xf32>
      %68 = vector.extract_strided_slice %21 {offsets = [6, 0], sizes = [1, 8], strides = [1, 1]} : vector<7x8xf32> to vector<1x8xf32>
      %69 = vector.shape_cast %68 : vector<1x8xf32> to vector<8xf32>
      %c6 = arith.constant 6 : index
      %c0_42 = arith.constant 0 : index
      %c0_43 = arith.constant 0 : index
      %70 = vector.load %arg8[%c6, %c0_42, %c0_43] : memref<22x16x8xf32, #tpu.memory_space<vmem>>, vector<16x16x8xf32>
      %71 = vector.shape_cast %69 : vector<8xf32> to vector<1x1x8xf32>
      %72 = vector.broadcast %71 : vector<1x1x8xf32> to vector<16x16x8xf32>
      %73 = arith.mulf %72, %70 : vector<16x16x8xf32>
      %74 = arith.addf %67, %73 : vector<16x16x8xf32>
      %c0_44 = arith.constant 0 : index
      %c0_45 = arith.constant 0 : index
      %c0_46 = arith.constant 0 : index
      %75 = vector.load %arg9[%c0_44, %c0_45, %c0_46] : memref<16x16x8xf32, #tpu.memory_space<vmem>>, vector<16x16x8xf32>
      tpu.vector_store %arg9[%c0_44, %c0_45, %c0_46], %74 {strides = array<i32>} : memref<16x16x8xf32, #tpu.memory_space<vmem>>, vector<16x16x8xf32>,
    } else {
    }
    %c0_i32_10 = arith.constant 0 : i32
    %14 = arith.cmpi sge, %arg1, %c0_i32_10 : i32
    %15 = arith.extui %14 : i1 to i32
    %c0_i32_11 = arith.constant 0 : i32
    %16 = arith.cmpi ne, %15, %c0_i32_11 : i32
    scf.if %16 {
      %c0_19 = arith.constant 0 : index
      %c0_20 = arith.constant 0 : index
      %21 = vector.load %arg4[%c0_19, %c0_20] : memref<7x8xf32, #tpu.memory_space<vmem>>, vector<7x8xf32>
      %22 = tpu.iota {dimensions = array<i32: 0>} : vector<16x1xi32>
      %c0_21 = arith.constant 0 : index
      %c0_22 = arith.constant 0 : index
      %c0_23 = arith.constant 0 : index
      %23 = vector.load %arg9[%c0_21, %c0_22, %c0_23] : memref<16x16x8xf32, #tpu.memory_space<vmem>>, vector<16x16x8xf32>
      %c3_i32 = arith.constant 3 : i32
      %24 = tpu.dynamic_rotate %1 by %c3_i32 dim 1 : vector<16x16x8xf32>, i32 -> vector<16x16x8xf32>
      %c3_i32_24 = arith.constant 3 : i32
      %25 = vector.broadcast %c3_i32_24 : i32 to vector<16x1xi32>
      %26 = arith.cmpi sge, %22, %25 : vector<16x1xi32>
      %c16_i32 = arith.constant 16 : i32
      %27 = vector.broadcast %c16_i32 : i32 to vector<16x1xi32>
      %28 = arith.cmpi slt, %22, %27 : vector<16x1xi32>
      %29 = arith.andi %26, %28 : vector<16x1xi1>
      %30 = vector.extract_strided_slice %21 {offsets = [0, 0], sizes = [1, 8], strides = [1, 1]} : vector<7x8xf32> to vector<1x8xf32>
      %31 = vector.shape_cast %30 : vector<1x8xf32> to vector<8xf32>
      %32 = arith.extui %29 : vector<16x1xi1> to vector<16x1xi32>
      %33 = arith.sitofp %32 : vector<16x1xi32> to vector<16x1xf32>
      %34 = vector.shape_cast %31 : vector<8xf32> to vector<1x8xf32>
      %35 = vector.broadcast %34 : vector<1x8xf32> to vector<16x8xf32>
      %36 = vector.broadcast %33 : vector<16x1xf32> to vector<16x8xf32>
      %37 = arith.mulf %35, %36 : vector<16x8xf32>
      %38 = vector.shape_cast %37 : vector<16x8xf32> to vector<1x16x8xf32>
      %39 = vector.broadcast %38 : vector<1x16x8xf32> to vector<16x16x8xf32>
      %40 = arith.mulf %39, %24 : vector<16x16x8xf32>
      %41 = arith.addf %23, %40 : vector<16x16x8xf32>
      %c2_i32 = arith.constant 2 : i32
      %42 = tpu.dynamic_rotate %1 by %c2_i32 dim 1 : vector<16x16x8xf32>, i32 -> vector<16x16x8xf32>
      %c2_i32_25 = arith.constant 2 : i32
      %43 = vector.broadcast %c2_i32_25 : i32 to vector<16x1xi32>
      %44 = arith.cmpi sge, %22, %43 : vector<16x1xi32>
      %c16_i32_26 = arith.constant 16 : i32
      %45 = vector.broadcast %c16_i32_26 : i32 to vector<16x1xi32>
      %46 = arith.cmpi slt, %22, %45 : vector<16x1xi32>
      %47 = arith.andi %44, %46 : vector<16x1xi1>
      %48 = vector.extract_strided_slice %21 {offsets = [1, 0], sizes = [1, 8], strides = [1, 1]} : vector<7x8xf32> to vector<1x8xf32>
      %49 = vector.shape_cast %48 : vector<1x8xf32> to vector<8xf32>
      %50 = arith.extui %47 : vector<16x1xi1> to vector<16x1xi32>
      %51 = arith.sitofp %50 : vector<16x1xi32> to vector<16x1xf32>
      %52 = vector.shape_cast %49 : vector<8xf32> to vector<1x8xf32>
      %53 = vector.broadcast %52 : vector<1x8xf32> to vector<16x8xf32>
      %54 = vector.broadcast %51 : vector<16x1xf32> to vector<16x8xf32>
      %55 = arith.mulf %53, %54 : vector<16x8xf32>
      %56 = vector.shape_cast %55 : vector<16x8xf32> to vector<1x16x8xf32>
      %57 = vector.broadcast %56 : vector<1x16x8xf32> to vector<16x16x8xf32>
      %58 = arith.mulf %57, %42 : vector<16x16x8xf32>
      %59 = arith.addf %41, %58 : vector<16x16x8xf32>
      %c1_i32_27 = arith.constant 1 : i32
      %60 = tpu.dynamic_rotate %1 by %c1_i32_27 dim 1 : vector<16x16x8xf32>, i32 -> vector<16x16x8xf32>
      %c1_i32_28 = arith.constant 1 : i32
      %61 = vector.broadcast %c1_i32_28 : i32 to vector<16x1xi32>
      %62 = arith.cmpi sge, %22, %61 : vector<16x1xi32>
      %c16_i32_29 = arith.constant 16 : i32
      %63 = vector.broadcast %c16_i32_29 : i32 to vector<16x1xi32>
      %64 = arith.cmpi slt, %22, %63 : vector<16x1xi32>
      %65 = arith.andi %62, %64 : vector<16x1xi1>
      %66 = vector.extract_strided_slice %21 {offsets = [2, 0], sizes = [1, 8], strides = [1, 1]} : vector<7x8xf32> to vector<1x8xf32>
      %67 = vector.shape_cast %66 : vector<1x8xf32> to vector<8xf32>
      %68 = arith.extui %65 : vector<16x1xi1> to vector<16x1xi32>
      %69 = arith.sitofp %68 : vector<16x1xi32> to vector<16x1xf32>
      %70 = vector.shape_cast %67 : vector<8xf32> to vector<1x8xf32>
      %71 = vector.broadcast %70 : vector<1x8xf32> to vector<16x8xf32>
      %72 = vector.broadcast %69 : vector<16x1xf32> to vector<16x8xf32>
      %73 = arith.mulf %71, %72 : vector<16x8xf32>
      %74 = vector.shape_cast %73 : vector<16x8xf32> to vector<1x16x8xf32>
      %75 = vector.broadcast %74 : vector<1x16x8xf32> to vector<16x16x8xf32>
      %76 = arith.mulf %75, %60 : vector<16x16x8xf32>
      %77 = arith.addf %59, %76 : vector<16x16x8xf32>
      %78 = vector.extract_strided_slice %21 {offsets = [3, 0], sizes = [1, 8], strides = [1, 1]} : vector<7x8xf32> to vector<1x8xf32>
      %79 = vector.shape_cast %78 : vector<1x8xf32> to vector<8xf32>
      %80 = vector.shape_cast %79 : vector<8xf32> to vector<1x1x8xf32>
      %81 = vector.broadcast %80 : vector<1x1x8xf32> to vector<16x16x8xf32>
      %82 = arith.mulf %81, %1 : vector<16x16x8xf32>
      %83 = arith.addf %77, %82 : vector<16x16x8xf32>
      %c15_i32 = arith.constant 15 : i32
      %84 = tpu.dynamic_rotate %1 by %c15_i32 dim 1 : vector<16x16x8xf32>, i32 -> vector<16x16x8xf32>
      %c0_i32_30 = arith.constant 0 : i32
      %85 = vector.broadcast %c0_i32_30 : i32 to vector<16x1xi32>
      %86 = arith.cmpi sge, %22, %85 : vector<16x1xi32>
      %c15_i32_31 = arith.constant 15 : i32
      %87 = vector.broadcast %c15_i32_31 : i32 to vector<16x1xi32>
      %88 = arith.cmpi slt, %22, %87 : vector<16x1xi32>
      %89 = arith.andi %86, %88 : vector<16x1xi1>
      %90 = vector.extract_strided_slice %21 {offsets = [4, 0], sizes = [1, 8], strides = [1, 1]} : vector<7x8xf32> to vector<1x8xf32>
      %91 = vector.shape_cast %90 : vector<1x8xf32> to vector<8xf32>
      %92 = arith.extui %89 : vector<16x1xi1> to vector<16x1xi32>
      %93 = arith.sitofp %92 : vector<16x1xi32> to vector<16x1xf32>
      %94 = vector.shape_cast %91 : vector<8xf32> to vector<1x8xf32>
      %95 = vector.broadcast %94 : vector<1x8xf32> to vector<16x8xf32>
      %96 = vector.broadcast %93 : vector<16x1xf32> to vector<16x8xf32>
      %97 = arith.mulf %95, %96 : vector<16x8xf32>
      %98 = vector.shape_cast %97 : vector<16x8xf32> to vector<1x16x8xf32>
      %99 = vector.broadcast %98 : vector<1x16x8xf32> to vector<16x16x8xf32>
      %100 = arith.mulf %99, %84 : vector<16x16x8xf32>
      %101 = arith.addf %83, %100 : vector<16x16x8xf32>
      %c14_i32 = arith.constant 14 : i32
      %102 = tpu.dynamic_rotate %1 by %c14_i32 dim 1 : vector<16x16x8xf32>, i32 -> vector<16x16x8xf32>
      %c0_i32_32 = arith.constant 0 : i32
      %103 = vector.broadcast %c0_i32_32 : i32 to vector<16x1xi32>
      %104 = arith.cmpi sge, %22, %103 : vector<16x1xi32>
      %c14_i32_33 = arith.constant 14 : i32
      %105 = vector.broadcast %c14_i32_33 : i32 to vector<16x1xi32>
      %106 = arith.cmpi slt, %22, %105 : vector<16x1xi32>
      %107 = arith.andi %104, %106 : vector<16x1xi1>
      %108 = vector.extract_strided_slice %21 {offsets = [5, 0], sizes = [1, 8], strides = [1, 1]} : vector<7x8xf32> to vector<1x8xf32>
      %109 = vector.shape_cast %108 : vector<1x8xf32> to vector<8xf32>
      %110 = arith.extui %107 : vector<16x1xi1> to vector<16x1xi32>
      %111 = arith.sitofp %110 : vector<16x1xi32> to vector<16x1xf32>
      %112 = vector.shape_cast %109 : vector<8xf32> to vector<1x8xf32>
      %113 = vector.broadcast %112 : vector<1x8xf32> to vector<16x8xf32>
      %114 = vector.broadcast %111 : vector<16x1xf32> to vector<16x8xf32>
      %115 = arith.mulf %113, %114 : vector<16x8xf32>
      %116 = vector.shape_cast %115 : vector<16x8xf32> to vector<1x16x8xf32>
      %117 = vector.broadcast %116 : vector<1x16x8xf32> to vector<16x16x8xf32>
      %118 = arith.mulf %117, %102 : vector<16x16x8xf32>
      %119 = arith.addf %101, %118 : vector<16x16x8xf32>
      %c13_i32 = arith.constant 13 : i32
      %120 = tpu.dynamic_rotate %1 by %c13_i32 dim 1 : vector<16x16x8xf32>, i32 -> vector<16x16x8xf32>
      %c0_i32_34 = arith.constant 0 : i32
      %121 = vector.broadcast %c0_i32_34 : i32 to vector<16x1xi32>
      %122 = arith.cmpi sge, %22, %121 : vector<16x1xi32>
      %c13_i32_35 = arith.constant 13 : i32
      %123 = vector.broadcast %c13_i32_35 : i32 to vector<16x1xi32>
      %124 = arith.cmpi slt, %22, %123 : vector<16x1xi32>
      %125 = arith.andi %122, %124 : vector<16x1xi1>
      %126 = vector.extract_strided_slice %21 {offsets = [6, 0], sizes = [1, 8], strides = [1, 1]} : vector<7x8xf32> to vector<1x8xf32>
      %127 = vector.shape_cast %126 : vector<1x8xf32> to vector<8xf32>
      %128 = arith.extui %125 : vector<16x1xi1> to vector<16x1xi32>
      %129 = arith.sitofp %128 : vector<16x1xi32> to vector<16x1xf32>
      %130 = vector.shape_cast %127 : vector<8xf32> to vector<1x8xf32>
      %131 = vector.broadcast %130 : vector<1x8xf32> to vector<16x8xf32>
      %132 = vector.broadcast %129 : vector<16x1xf32> to vector<16x8xf32>
      %133 = arith.mulf %131, %132 : vector<16x8xf32>
      %134 = vector.shape_cast %133 : vector<16x8xf32> to vector<1x16x8xf32>
      %135 = vector.broadcast %134 : vector<1x16x8xf32> to vector<16x16x8xf32>
      %136 = arith.mulf %135, %120 : vector<16x16x8xf32>
      %137 = arith.addf %119, %136 : vector<16x16x8xf32>
      %c0_36 = arith.constant 0 : index
      %c0_37 = arith.constant 0 : index
      %c0_38 = arith.constant 0 : index
      %138 = vector.load %arg9[%c0_36, %c0_37, %c0_38] : memref<16x16x8xf32, #tpu.memory_space<vmem>>, vector<16x16x8xf32>
      tpu.vector_store %arg9[%c0_36, %c0_37, %c0_38], %137 {strides = array<i32>} : memref<16x16x8xf32, #tpu.memory_space<vmem>>, vector<16x16x8xf32>,
    } else {
    }
    %c0_12 = arith.constant 0 : index
    %c0_13 = arith.constant 0 : index
    %c0_14 = arith.constant 0 : index
    %17 = vector.load %arg9[%c0_12, %c0_13, %c0_14] : memref<16x16x8xf32, #tpu.memory_space<vmem>>, vector<16x16x8xf32>
    %c0_15 = arith.constant 0 : index
    %c0_16 = arith.constant 0 : index
    %c0_17 = arith.constant 0 : index
    %c0_18 = arith.constant 0 : index
    %18 = vector.load %arg7[%c0_15, %c0_16, %c0_17, %c0_18] : memref<1x16x16x8xf32, #tpu.memory_space<vmem>>, vector<1x16x16x8xf32>
    %19 = vector.shape_cast %18 : vector<1x16x16x8xf32> to vector<16x16x8xf32>
    %20 = vector.shape_cast %17 : vector<16x16x8xf32> to vector<1x16x16x8xf32>
    tpu.vector_store %arg7[%c0_15, %c0_16, %c0_17, %c0_18], %20 {strides = array<i32>} : memref<1x16x16x8xf32, #tpu.memory_space<vmem>>, vector<1x16x16x8xf32>,
    return
  }
  func.func @transform_0(%arg0: i32, %arg1: i32) -> (i32, i32, i32, i32) {
    %c0_i32 = arith.constant 0 : i32
    %c0_i32_0 = arith.constant 0 : i32
    %c0_i32_1 = arith.constant 0 : i32
    return %arg0, %c0_i32, %c0_i32_0, %arg1 : i32, i32, i32, i32
  }
  func.func @transform_1(%arg0: i32, %arg1: i32) -> (i32, i32) {
    %c0_i32 = arith.constant 0 : i32
    %c0_i32_0 = arith.constant 0 : i32
    return %c0_i32, %arg1 : i32, i32
  }
  func.func @transform_2(%arg0: i32, %arg1: i32) -> (i32, i32) {
    %c0_i32 = arith.constant 0 : i32
    %c0_i32_0 = arith.constant 0 : i32
    return %c0_i32, %arg1 : i32, i32
  }
  func.func @transform_3(%arg0: i32, %arg1: i32) -> (i32, i32) {
    %c0_i32 = arith.constant 0 : i32
    %c0_i32_0 = arith.constant 0 : i32
    return %c0_i32, %arg1 : i32, i32
  }
  func.func @transform_4(%arg0: i32, %arg1: i32) -> (i32, i32) {
    %c0_i32 = arith.constant 0 : i32
    %c0_i32_0 = arith.constant 0 : i32
    return %c0_i32, %arg1 : i32, i32
  }
  func.func @transform_5(%arg0: i32, %arg1: i32) -> (i32, i32, i32, i32) {
    %c0_i32 = arith.constant 0 : i32
    %c0_i32_0 = arith.constant 0 : i32
    %c0_i32_1 = arith.constant 0 : i32
    return %arg0, %c0_i32, %c0_i32_0, %arg1 : i32, i32, i32, i32
  }
}

</mosaic_0001>

<llo_original>
// kernel: tpu_custom_call.1
$region0: #{tpu_custom_call.1}
  #allocation0 [shape = 'u32[]', space=smem, size = 0x4, offset = 0x4, fixed_abs, tag = 'smem constant byte address 0x4 - core index']
  #allocation1 [shape = 'u32[144,128]{1,0:T(1,128)}', space=vmem, size = 0x12000, scoped, tag = 'internal scratch']
  #allocation2 [shape = 'f32[22,16,8]{2,1,0:T(8,128)}', space=vmem, size = 0x2c000, scoped, tag = 'scratch operand']
  #allocation3 [shape = 'f32[16,16,8]{2,1,0:T(8,128)}', space=vmem, size = 0x20000, scoped, tag = 'scratch operand']
  %s0 = inlined_call_operand.vmem [shape: f32[2,16,16,8], index: 0, kind: input, shape index: {}]
  %s1 = inlined_call_operand.vmem [shape: f32[7,8], index: 1, kind: input, shape index: {}]
  %s2 = inlined_call_operand.vmem [shape: f32[7,8], index: 2, kind: input, shape index: {}]
  %s3 = inlined_call_operand.vmem [shape: f32[1,8], index: 3, kind: input, shape index: {}]
  %s4 = inlined_call_operand.vmem [shape: f32[1,8], index: 4, kind: input, shape index: {}]
  %s5 = inlined_call_operand.vmem [shape: f32[2,16,16,8], index: 5, kind: output, shape index: {}]
  %s6 = sld [smem:[#allocation0]]
  $region61: #{tpu_custom_call.1} parent=0
    _
  %s8 = ssub.s32 1, %s6
  %s9 = scalar_select 0, %s8, %s6
  loop: start=0, step=1, limit=4
  $region2: #{tpu_custom_call.1} parent=0 // loop_pre_header
    _
  $region3: #{tpu_custom_call.1} parent=0 // loop_header
    %s11 = sphi 0, %s15
    %p12 = scmp.ge.s32.totalorder %s11, 4
    %s18 = sphi 0, %s30
    %s19 = sphi 0, %s26
    %s20 = sphi 0, %s18
    %s21 = sphi 0, %s19
    %s22 = sphi 0, %s20
    %s23 = sphi 0, %s21
    %s35 = sphi 0, %s37
    %s38 = sphi 0, %s35
    %s39 = sphi 0, %s38
    %s55 = sphi 0, %s39
    %s61 = sphi 0, %s63
    %s64 = sphi 0, %s61
    %s65 = sphi 0, %s64
    %s81 = sphi 0, %s65
    %s87 = sphi 0, %s89
    %s90 = sphi 0, %s87
    %s91 = sphi 0, %s90
    %s107 = sphi 0, %s91
    %s113 = sphi 0, %s115
    %s116 = sphi 0, %s113
    %s117 = sphi 0, %s116
    %s133 = sphi 0, %s117
    %s139 = sphi 0, %s141
    %s142 = sphi 0, %s139
    %s143 = sphi 0, %s142
    %s159 = sphi 0, %s143
    %s167 = sphi 0, %s169
    %s170 = sphi 0, %s167
    %s171 = sphi 0, %s170
    %s187 = sphi 0, %s171
  $region4: #{tpu_custom_call.1} parent=0 // loop_header_branch
    %14 = sbr.rel (%p12) target = $region8
  $region5: #{tpu_custom_call.1} parent=0 // loop_body
    %s16 = ssub.s32 %s11, 1
    %s17 = ssub.s32 %s11, 2
    %s24 = sadd.s32 1, %s19
    %p25 = scmp.ge.s32.totalorder %s24, 1
    %s26 = scalar_select %p25, 0, %s24
    %s27 = sadd.s32 1, %s18
    %s28 = scalar_select %p25, %s27, %s18
    %p29 = scmp.ge.s32.totalorder %s28, 2
    %s30 = scalar_select %p29, 0, %s28
    %s31 = ssub.s32 %s18, %s30
    %s32 = ssub.s32 %s19, %s26
    %s33 = sor.u32 %s31, %s32
    %p34 = scmp.eq.s32.totalorder %s33, 0
    %s36 = sadd.s32 %s35, 1
    %s37 = scalar_select %p34, %s35, %s36
    %p40 = pneg %p34
    %p41 = scmp.eq.s32.totalorder %s11, 1
    %p42 = por %p40, %p41
    %p43 = scmp.ne.s32.totalorder %s35, %s38
    %p44 = scmp.eq.s32.totalorder %s11, 0
    %p45 = por %p43, %p44
    %p46 = scmp.ne.s32.totalorder %s35, %s38
    %p47 = scmp.eq.s32.totalorder %s16, 1
    %p48 = por %p46, %p47
    %p49 = scmp.ne.s32.totalorder %s38, %s39
    %p50 = scmp.eq.s32.totalorder %s16, 0
    %p51 = por %p49, %p50
    %p52 = scmp.ne.s32.totalorder %s38, %s39
    %p53 = scmp.eq.s32.totalorder %s17, 1
    %p54 = por %p52, %p53
    %p56 = scmp.ne.s32.totalorder %s39, %s55
    %p57 = scmp.eq.s32.totalorder %s17, 0
    %p58 = por %p56, %p57
    %s59 = ssub.s32 %s19, %s26
    %p60 = scmp.eq.s32.totalorder %s59, 0
    %s62 = sadd.s32 %s61, 1
    %s63 = scalar_select %p60, %s61, %s62
    %p66 = pneg %p60
    %p67 = scmp.eq.s32.totalorder %s11, 1
    %p68 = por %p66, %p67
    %p69 = scmp.ne.s32.totalorder %s61, %s64
    %p70 = scmp.eq.s32.totalorder %s11, 0
    %p71 = por %p69, %p70
    %p72 = scmp.ne.s32.totalorder %s61, %s64
    %p73 = scmp.eq.s32.totalorder %s16, 1
    %p74 = por %p72, %p73
    %p75 = scmp.ne.s32.totalorder %s64, %s65
    %p76 = scmp.eq.s32.totalorder %s16, 0
    %p77 = por %p75, %p76
    %p78 = scmp.ne.s32.totalorder %s64, %s65
    %p79 = scmp.eq.s32.totalorder %s17, 1
    %p80 = por %p78, %p79
    %p82 = scmp.ne.s32.totalorder %s65, %s81
    %p83 = scmp.eq.s32.totalorder %s17, 0
    %p84 = por %p82, %p83
    %s85 = ssub.s32 %s19, %s26
    %p86 = scmp.eq.s32.totalorder %s85, 0
    %s88 = sadd.s32 %s87, 1
    %s89 = scalar_select %p86, %s87, %s88
    %p92 = pneg %p86
    %p93 = scmp.eq.s32.totalorder %s11, 1
    %p94 = por %p92, %p93
    %p95 = scmp.ne.s32.totalorder %s87, %s90
    %p96 = scmp.eq.s32.totalorder %s11, 0
    %p97 = por %p95, %p96
    %p98 = scmp.ne.s32.totalorder %s87, %s90
    %p99 = scmp.eq.s32.totalorder %s16, 1
    %p100 = por %p98, %p99
    %p101 = scmp.ne.s32.totalorder %s90, %s91
    %p102 = scmp.eq.s32.totalorder %s16, 0
    %p103 = por %p101, %p102
    %p104 = scmp.ne.s32.totalorder %s90, %s91
    %p105 = scmp.eq.s32.totalorder %s17, 1
    %p106 = por %p104, %p105
    %p108 = scmp.ne.s32.totalorder %s91, %s107
    %p109 = scmp.eq.s32.totalorder %s17, 0
    %p110 = por %p108, %p109
    %s111 = ssub.s32 %s19, %s26
    %p112 = scmp.eq.s32.totalorder %s111, 0
    %s114 = sadd.s32 %s113, 1
    %s115 = scalar_select %p112, %s113, %s114
    %p118 = pneg %p112
    %p119 = scmp.eq.s32.totalorder %s11, 1
    %p120 = por %p118, %p119
    %p121 = scmp.ne.s32.totalorder %s113, %s116
    %p122 = scmp.eq.s32.totalorder %s11, 0
    %p123 = por %p121, %p122
    %p124 = scmp.ne.s32.totalorder %s113, %s116
    %p125 = scmp.eq.s32.totalorder %s16, 1
    %p126 = por %p124, %p125
    %p127 = scmp.ne.s32.totalorder %s116, %s117
    %p128 = scmp.eq.s32.totalorder %s16, 0
    %p129 = por %p127, %p128
    %p130 = scmp.ne.s32.totalorder %s116, %s117
    %p131 = scmp.eq.s32.totalorder %s17, 1
    %p132 = por %p130, %p131
    %p134 = scmp.ne.s32.totalorder %s117, %s133
    %p135 = scmp.eq.s32.totalorder %s17, 0
    %p136 = por %p134, %p135
    %s137 = ssub.s32 %s19, %s26
    %p138 = scmp.eq.s32.totalorder %s137, 0
    %s140 = sadd.s32 %s139, 1
    %s141 = scalar_select %p138, %s139, %s140
    %p144 = pneg %p138
    %p145 = scmp.eq.s32.totalorder %s11, 1
    %p146 = por %p144, %p145
    %p147 = scmp.ne.s32.totalorder %s139, %s142
    %p148 = scmp.eq.s32.totalorder %s11, 0
    %p149 = por %p147, %p148
    %p150 = scmp.ne.s32.totalorder %s139, %s142
    %p151 = scmp.eq.s32.totalorder %s16, 1
    %p152 = por %p150, %p151
    %p153 = scmp.ne.s32.totalorder %s142, %s143
    %p154 = scmp.eq.s32.totalorder %s16, 0
    %p155 = por %p153, %p154
    %p156 = scmp.ne.s32.totalorder %s142, %s143
    %p157 = scmp.eq.s32.totalorder %s17, 1
    %p158 = por %p156, %p157
    %p160 = scmp.ne.s32.totalorder %s143, %s159
    %p161 = scmp.eq.s32.totalorder %s17, 0
    %p162 = por %p160, %p161
    %s163 = ssub.s32 %s18, %s30
    %s164 = ssub.s32 %s19, %s26
    %s165 = sor.u32 %s163, %s164
    %p166 = scmp.eq.s32.totalorder %s165, 0
    %s168 = sadd.s32 %s167, 1
    %s169 = scalar_select %p166, %s167, %s168
    %p172 = pneg %p166
    %p173 = scmp.eq.s32.totalorder %s11, 1
    %p174 = por %p172, %p173
    %p175 = scmp.ne.s32.totalorder %s167, %s170
    %p176 = scmp.eq.s32.totalorder %s11, 0
    %p177 = por %p175, %p176
    %p178 = scmp.ne.s32.totalorder %s167, %s170
    %p179 = scmp.eq.s32.totalorder %s16, 1
    %p180 = por %p178, %p179
    %p181 = scmp.ne.s32.totalorder %s170, %s171
    %p182 = scmp.eq.s32.totalorder %s16, 0
    %p183 = por %p181, %p182
    %p184 = scmp.ne.s32.totalorder %s170, %s171
    %p185 = scmp.eq.s32.totalorder %s17, 1
    %p186 = por %p184, %p185
    %p188 = scmp.ne.s32.totalorder %s171, %s187
    %p189 = scmp.eq.s32.totalorder %s17, 0
    %p190 = por %p188, %p189
    %p191 = scmp.le.s32.totalorder 1, %s11
    %p192 = scmp.lt.s32.totalorder %s11, 3
    %p193 = pnand %p191, %p192
    %p194 = pneg %p193
    // Predicated region
    $region9: #{tpu_custom_call.1} parent=5 // pred_check
      _
    $region10: #{tpu_custom_call.1} parent=5 // pred_check_branch
      %196 = sbr.rel (%p193) target = $region12
    $region11: #{tpu_custom_call.1} parent=5 // pred_region
      %s197 = ssub.s32 %s11, 1
      // Predicated region
      $region13: #{tpu_custom_call.1} parent=11 // pred_check
        %p198 = pneg %p77
      $region14: #{tpu_custom_call.1} parent=11 // pred_check_branch
        %200 = sbr.rel (%p198) target = $region16
      $region15: #{tpu_custom_call.1} parent=11 // pred_region
        %p201 = scmp.lt.s32.totalorder %s21, 0
        %s202 = scalar_select %p201, %s21, 0
        %s203 = smul.addr %s202, 8
        %s204 = scalar_lea.vmem %s1, %s203
      $region16: #{tpu_custom_call.1} parent=11 // pred_fallthru
        _
      // Predicated region
      $region17: #{tpu_custom_call.1} parent=11 // pred_check
        %p205 = pneg %p103
      $region18: #{tpu_custom_call.1} parent=11 // pred_check_branch
        %207 = sbr.rel (%p205) target = $region20
      $region19: #{tpu_custom_call.1} parent=11 // pred_region
        %p208 = scmp.lt.s32.totalorder %s21, 0
        %s209 = scalar_select %p208, %s21, 0
        %s210 = smul.addr %s209, 8
        %s211 = scalar_lea.vmem %s2, %s210
      $region20: #{tpu_custom_call.1} parent=11 // pred_fallthru
        _
      // Predicated region
      $region21: #{tpu_custom_call.1} parent=11 // pred_check
        %p212 = pneg %p129
      $region22: #{tpu_custom_call.1} parent=11 // pred_check_branch
        %214 = sbr.rel (%p212) target = $region24
      $region23: #{tpu_custom_call.1} parent=11 // pred_region
        %p215 = scmp.lt.s32.totalorder %s21, 0
        %s216 = scalar_select %p215, %s21, 0
        %s217 = scalar_lea.vmem %s3, %s216
      $region24: #{tpu_custom_call.1} parent=11 // pred_fallthru
        _
      // Predicated region
      $region25: #{tpu_custom_call.1} parent=11 // pred_check
        %p218 = pneg %p155
      $region26: #{tpu_custom_call.1} parent=11 // pred_check_branch
        %220 = sbr.rel (%p218) target = $region28
      $region27: #{tpu_custom_call.1} parent=11 // pred_region
        %p221 = scmp.lt.s32.totalorder %s21, 0
        %s222 = scalar_select %p221, %s21, 0
        %s223 = scalar_lea.vmem %s4, %s222
      $region28: #{tpu_custom_call.1} parent=11 // pred_fallthru
        _
    $region12: #{tpu_custom_call.1} parent=5 // pred_fallthru
      _
    %p224 = scmp.lt.s32.totalorder %s11, 2
    // Predicated region
    $region29: #{tpu_custom_call.1} parent=5 // pred_check
      %p225 = pneg %p224
    $region30: #{tpu_custom_call.1} parent=5 // pred_check_branch
      %227 = sbr.rel (%p225) target = $region32
    $region31: #{tpu_custom_call.1} parent=5 // pred_region
      // Predicated region
      $region33: #{tpu_custom_call.1} parent=31 // pred_check
        %p228 = pneg %p45
      $region34: #{tpu_custom_call.1} parent=31 // pred_check_branch
        %230 = sbr.rel (%p228) target = $region36
      $region35: #{tpu_custom_call.1} parent=31 // pred_region
        %p231 = scmp.lt.s32.totalorder %s18, 1
        %s232 = scalar_select %p231, %s18, 1
        %p233 = scmp.lt.s32.totalorder %s19, 0
        %s234 = scalar_select %p233, %s19, 0
        %s235 = smul.addr %s232, 32
        %s236 = sadd.s32 %s234, %s235
        %s237 = smul.addr %s236, 8
        %s238 = scalar_lea.vmem %s0, %s237
      $region36: #{tpu_custom_call.1} parent=31 // pred_fallthru
        _
    $region32: #{tpu_custom_call.1} parent=5 // pred_fallthru
      _
    %p239 = scmp.le.s32.totalorder 1, %s11
    %p240 = scmp.lt.s32.totalorder %s11, 3
    %p241 = pnand %p239, %p240
    %p242 = pneg %p241
    // Predicated region
    $region37: #{tpu_custom_call.1} parent=5 // pred_check
      _
    $region38: #{tpu_custom_call.1} parent=5 // pred_check_branch
      %244 = sbr.rel (%p241) target = $region40
    $region39: #{tpu_custom_call.1} parent=5 // pred_region
      %s245 = ssub.s32 %s11, 1
      %p246 = scmp.lt.s32.totalorder %s20, 1
      %s247 = scalar_select %p246, %s20, 1
      %p248 = scmp.lt.s32.totalorder %s21, 0
      %s249 = scalar_select %p248, %s21, 0
      %s250 = smul.addr %s247, 32
      %s251 = sadd.s32 %s249, %s250
      %s252 = smul.addr %s251, 8
      %s253 = scalar_lea.vmem %s0, %s252
      %p254 = pneg %p51
      %p255 = pneg %p48
      %p256 = scmp.lt.s32.totalorder %s21, 0
      %s257 = scalar_select %p256, %s21, 0
      %s258 = smul.addr %s257, 8
      %s259 = scalar_lea.vmem %s1, %s258
      %p260 = pneg %p77
      %p261 = pneg %p74
      %p262 = scmp.lt.s32.totalorder %s21, 0
      %s263 = scalar_select %p262, %s21, 0
      %s264 = smul.addr %s263, 8
      %s265 = scalar_lea.vmem %s2, %s264
      %p266 = pneg %p103
      %p267 = pneg %p100
      %p268 = scmp.lt.s32.totalorder %s21, 0
      %s269 = scalar_select %p268, %s21, 0
      %s270 = scalar_lea.vmem %s3, %s269
      %p271 = pneg %p129
      %p272 = pneg %p126
      %p273 = scmp.lt.s32.totalorder %s21, 0
      %s274 = scalar_select %p273, %s21, 0
      %s275 = scalar_lea.vmem %s4, %s274
      %p276 = pneg %p155
      %p277 = pneg %p152
      %p278 = pneg %p183
      %p279 = pneg %p180
      %p280 = scmp.lt.s32.totalorder %s20, 1
      %s281 = scalar_select %p280, %s20, 1
      %p282 = scmp.lt.s32.totalorder %s21, 0
      %s283 = scalar_select %p282, %s21, 0
      %s284 = smul.addr %s281, 32
      %s285 = sadd.s32 %s283, %s284
      %s286 = smul.addr %s285, 8
      %s287 = scalar_lea.vmem %s5, %s286
      %p288 = scmp.lt.s32.totalorder %s20, 1
      %s289 = scalar_select %p288, %s20, 1
      %p290 = scmp.lt.s32.totalorder %s21, 0
      %s291 = scalar_select %p290, %s21, 0
      %s292 = smul.addr %s289, 32
      %s293 = sadd.s32 %s291, %s292
      %s294 = smul.addr %s293, 8
      %s295 = scalar_lea.vmem %s0, %s294
      %p296 = scmp.lt.s32.totalorder %s21, 0
      %s297 = scalar_select %p296, %s21, 0
      %s298 = smul.addr %s297, 8
      %s299 = scalar_lea.vmem %s1, %s298
      %p300 = scmp.lt.s32.totalorder %s21, 0
      %s301 = scalar_select %p300, %s21, 0
      %s302 = smul.addr %s301, 8
      %s303 = scalar_lea.vmem %s2, %s302
      %p304 = scmp.lt.s32.totalorder %s21, 0
      %s305 = scalar_select %p304, %s21, 0
      %s306 = scalar_lea.vmem %s3, %s305
      %p307 = scmp.lt.s32.totalorder %s21, 0
      %s308 = scalar_select %p307, %s21, 0
      %s309 = scalar_lea.vmem %s4, %s308
      %p310 = scmp.lt.s32.totalorder %s20, 1
      %s311 = scalar_select %p310, %s20, 1
      %p312 = scmp.lt.s32.totalorder %s21, 0
      %s313 = scalar_select %p312, %s21, 0
      %s314 = smul.addr %s311, 32
      %s315 = sadd.s32 %s313, %s314
      %s316 = smul.addr %s315, 8
      %s317 = scalar_lea.vmem %s5, %s316
      %v318 = vld [vmem:[%s295] sm:$0xff]
      %v319 = vld [vmem:[%s295 + $0x8] sm:$0xff]
      %v320 = vld [vmem:[%s295 + $0x10] sm:$0xff]
      %v321 = vld [vmem:[%s295 + $0x18] sm:$0xff]
      %v322 = vld [vmem:[%s295 + $0x20] sm:$0xff]
      %v323 = vld [vmem:[%s295 + $0x28] sm:$0xff]
      %v324 = vld [vmem:[%s295 + $0x30] sm:$0xff]
      %v325 = vld [vmem:[%s295 + $0x38] sm:$0xff]
      %v326 = vld [vmem:[%s295 + $0x40] sm:$0xff]
      %v327 = vld [vmem:[%s295 + $0x48] sm:$0xff]
      %v328 = vld [vmem:[%s295 + $0x50] sm:$0xff]
      %v329 = vld [vmem:[%s295 + $0x58] sm:$0xff]
      %v330 = vld [vmem:[%s295 + $0x60] sm:$0xff]
      %v331 = vld [vmem:[%s295 + $0x68] sm:$0xff]
      %v332 = vld [vmem:[%s295 + $0x70] sm:$0xff]
      %v333 = vld [vmem:[%s295 + $0x78] sm:$0xff]
      %v334 = vld [vmem:[%s295 + $0x80] sm:$0xff]
      %v335 = vld [vmem:[%s295 + $0x88] sm:$0xff]
      %v336 = vld [vmem:[%s295 + $0x90] sm:$0xff]
      %v337 = vld [vmem:[%s295 + $0x98] sm:$0xff]
      %v338 = vld [vmem:[%s295 + $0xa0] sm:$0xff]
      %v339 = vld [vmem:[%s295 + $0xa8] sm:$0xff]
      %v340 = vld [vmem:[%s295 + $0xb0] sm:$0xff]
      %v341 = vld [vmem:[%s295 + $0xb8] sm:$0xff]
      %v342 = vld [vmem:[%s295 + $0xc0] sm:$0xff]
      %v343 = vld [vmem:[%s295 + $0xc8] sm:$0xff]
      %v344 = vld [vmem:[%s295 + $0xd0] sm:$0xff]
      %v345 = vld [vmem:[%s295 + $0xd8] sm:$0xff]
      %v346 = vld [vmem:[%s295 + $0xe0] sm:$0xff]
      %v347 = vld [vmem:[%s295 + $0xe8] sm:$0xff]
      %v348 = vld [vmem:[%s295 + $0xf0] sm:$0xff]
      %v349 = vld [vmem:[%s295 + $0xf8] sm:$0xff]
      %v350 = vld [vmem:[%s306] sm:$0x1]
      %v352 = vlaneseq
      %v353 = vshrl.u32 %v352, 7
      %v354 = vsub.s32 0, %v353
      %v355 = vrot.slane %v350, %v354
      %v357 = vmul.f32 %v318, %v355
      %v358 = vmul.f32 %v319, %v355
      %v359 = vmul.f32 %v320, %v355
      %v360 = vmul.f32 %v321, %v355
      %v361 = vmul.f32 %v322, %v355
      %v362 = vmul.f32 %v323, %v355
      %v363 = vmul.f32 %v324, %v355
      %v364 = vmul.f32 %v325, %v355
      %v365 = vmul.f32 %v326, %v355
      %v366 = vmul.f32 %v327, %v355
      %v367 = vmul.f32 %v328, %v355
      %v368 = vmul.f32 %v329, %v355
      %v369 = vmul.f32 %v330, %v355
      %v370 = vmul.f32 %v331, %v355
      %v371 = vmul.f32 %v332, %v355
      %v372 = vmul.f32 %v333, %v355
      %v373 = vmul.f32 %v334, %v355
      %v374 = vmul.f32 %v335, %v355
      %v375 = vmul.f32 %v336, %v355
      %v376 = vmul.f32 %v337, %v355
      %v377 = vmul.f32 %v338, %v355
      %v378 = vmul.f32 %v339, %v355
      %v379 = vmul.f32 %v340, %v355
      %v380 = vmul.f32 %v341, %v355
      %v381 = vmul.f32 %v342, %v355
      %v382 = vmul.f32 %v343, %v355
      %v383 = vmul.f32 %v344, %v355
      %v384 = vmul.f32 %v345, %v355
      %v385 = vmul.f32 %v346, %v355
      %v386 = vmul.f32 %v347, %v355
      %v387 = vmul.f32 %v348, %v355
      %v388 = vmul.f32 %v349, %v355
      %v389 = vld [vmem:[%s309] sm:$0x1]
      %v391 = vlaneseq
      %v392 = vshrl.u32 %v391, 7
      %v393 = vsub.s32 0, %v392
      %v394 = vrot.slane %v389, %v393
      %v396 = vadd.f32 %v357, %v394
      %v397 = vadd.f32 %v358, %v394
      %v398 = vadd.f32 %v359, %v394
      %v399 = vadd.f32 %v360, %v394
      %v400 = vadd.f32 %v361, %v394
      %v401 = vadd.f32 %v362, %v394
      %v402 = vadd.f32 %v363, %v394
      %v403 = vadd.f32 %v364, %v394
      %v404 = vadd.f32 %v365, %v394
      %v405 = vadd.f32 %v366, %v394
      %v406 = vadd.f32 %v367, %v394
      %v407 = vadd.f32 %v368, %v394
      %v408 = vadd.f32 %v369, %v394
      %v409 = vadd.f32 %v370, %v394
      %v410 = vadd.f32 %v371, %v394
      %v411 = vadd.f32 %v372, %v394
      %v412 = vadd.f32 %v373, %v394
      %v413 = vadd.f32 %v374, %v394
      %v414 = vadd.f32 %v375, %v394
      %v415 = vadd.f32 %v376, %v394
      %v416 = vadd.f32 %v377, %v394
      %v417 = vadd.f32 %v378, %v394
      %v418 = vadd.f32 %v379, %v394
      %v419 = vadd.f32 %v380, %v394
      %v420 = vadd.f32 %v381, %v394
      %v421 = vadd.f32 %v382, %v394
      %v422 = vadd.f32 %v383, %v394
      %v423 = vadd.f32 %v384, %v394
      %v424 = vadd.f32 %v385, %v394
      %v425 = vadd.f32 %v386, %v394
      %v426 = vadd.f32 %v387, %v394
      %v427 = vadd.f32 %v388, %v394
      %vm428 = vcmask 64512
      %429 = vst.msk [vmem:[#allocation3] sm:$0xff] %vm428, %v396
      %430 = vst.msk [vmem:[#allocation3 + $0x8] sm:$0xff] %vm428, %v397
      %431 = vst.msk [vmem:[#allocation3 + $0x10] sm:$0xff] %vm428, %v398
      %432 = vst.msk [vmem:[#allocation3 + $0x18] sm:$0xff] %vm428, %v399
      %433 = vst.msk [vmem:[#allocation3 + $0x20] sm:$0xff] %vm428, %v400
      %434 = vst.msk [vmem:[#allocation3 + $0x28] sm:$0xff] %vm428, %v401
      %435 = vst.msk [vmem:[#allocation3 + $0x30] sm:$0xff] %vm428, %v402
      %436 = vst.msk [vmem:[#allocation3 + $0x38] sm:$0xff] %vm428, %v403
      %437 = vst.msk [vmem:[#allocation3 + $0x40] sm:$0xff] %vm428, %v404
      %438 = vst.msk [vmem:[#allocation3 + $0x48] sm:$0xff] %vm428, %v405
      %439 = vst.msk [vmem:[#allocation3 + $0x50] sm:$0xff] %vm428, %v406
      %440 = vst.msk [vmem:[#allocation3 + $0x58] sm:$0xff] %vm428, %v407
      %441 = vst.msk [vmem:[#allocation3 + $0x60] sm:$0xff] %vm428, %v408
      %442 = vst.msk [vmem:[#allocation3 + $0x68] sm:$0xff] %vm428, %v409
      %443 = vst.msk [vmem:[#allocation3 + $0x70] sm:$0xff] %vm428, %v410
      %444 = vst.msk [vmem:[#allocation3 + $0x78] sm:$0xff] %vm428, %v411
      %445 = vst.msk [vmem:[#allocation3 + $0x80] sm:$0xff] %vm428, %v412
      %446 = vst.msk [vmem:[#allocation3 + $0x88] sm:$0xff] %vm428, %v413
      %447 = vst.msk [vmem:[#allocation3 + $0x90] sm:$0xff] %vm428, %v414
      %448 = vst.msk [vmem:[#allocation3 + $0x98] sm:$0xff] %vm428, %v415
      %449 = vst.msk [vmem:[#allocation3 + $0xa0] sm:$0xff] %vm428, %v416
      %450 = vst.msk [vmem:[#allocation3 + $0xa8] sm:$0xff] %vm428, %v417
      %451 = vst.msk [vmem:[#allocation3 + $0xb0] sm:$0xff] %vm428, %v418
      %452 = vst.msk [vmem:[#allocation3 + $0xb8] sm:$0xff] %vm428, %v419
      %453 = vst.msk [vmem:[#allocation3 + $0xc0] sm:$0xff] %vm428, %v420
      %454 = vst.msk [vmem:[#allocation3 + $0xc8] sm:$0xff] %vm428, %v421
      %455 = vst.msk [vmem:[#allocation3 + $0xd0] sm:$0xff] %vm428, %v422
      %456 = vst.msk [vmem:[#allocation3 + $0xd8] sm:$0xff] %vm428, %v423
      %457 = vst.msk [vmem:[#allocation3 + $0xe0] sm:$0xff] %vm428, %v424
      %458 = vst.msk [vmem:[#allocation3 + $0xe8] sm:$0xff] %vm428, %v425
      %459 = vst.msk [vmem:[#allocation3 + $0xf0] sm:$0xff] %vm428, %v426
      %460 = vst.msk [vmem:[#allocation3 + $0xf8] sm:$0xff] %vm428, %v427
      %p461 = scmp.lt.s32.totalorder %s21, 1
      // Predicated region
      $region41: #{tpu_custom_call.1} parent=39 // pred_check
        %p462 = pneg %p461
      $region42: #{tpu_custom_call.1} parent=39 // pred_check_branch
        %464 = sbr.rel (%p462) target = $region44
      $region43: #{tpu_custom_call.1} parent=39 // pred_region
        %v465 = vld [vmem:[%s299] sm:$0x7f]
        %466 = vst.msk [vmem:[#allocation2] sm:$0xff] %vm428, 0.0
        %467 = vst.msk [vmem:[#allocation2 + $0x8] sm:$0xff] %vm428, 0.0
        %468 = vst.msk [vmem:[#allocation2 + $0x10] sm:$0xff] %vm428, 0.0
        %469 = vst.msk [vmem:[#allocation2 + $0x18] sm:$0xff] %vm428, 0.0
        %470 = vst.msk [vmem:[#allocation2 + $0x20] sm:$0xff] %vm428, 0.0
        %471 = vst.msk [vmem:[#allocation2 + $0x28] sm:$0xff] %vm428, 0.0
        %s472 = scalar_lea.vmem [#allocation2], 304
        %473 = vst.msk [vmem:[%s472] sm:$0xff] %vm428, 0.0
        %474 = vst.msk [vmem:[%s472 + $0x8] sm:$0xff] %vm428, 0.0
        %475 = vst.msk [vmem:[%s472 + $0x10] sm:$0xff] %vm428, 0.0
        %476 = vst.msk [vmem:[%s472 + $0x18] sm:$0xff] %vm428, 0.0
        %477 = vst.msk [vmem:[%s472 + $0x20] sm:$0xff] %vm428, 0.0
        %478 = vst.msk [vmem:[%s472 + $0x28] sm:$0xff] %vm428, 0.0
        %s479 = scalar_lea.vmem [#allocation2], 48
        %480 = vst.msk [vmem:[%s479] sm:$0xff] %vm428, %v318
        %481 = vst.msk [vmem:[%s479 + $0x8] sm:$0xff] %vm428, %v319
        %482 = vst.msk [vmem:[%s479 + $0x10] sm:$0xff] %vm428, %v320
        %483 = vst.msk [vmem:[%s479 + $0x18] sm:$0xff] %vm428, %v321
        %484 = vst.msk [vmem:[%s479 + $0x20] sm:$0xff] %vm428, %v322
        %485 = vst.msk [vmem:[%s479 + $0x28] sm:$0xff] %vm428, %v323
        %486 = vst.msk [vmem:[%s479 + $0x30] sm:$0xff] %vm428, %v324
        %487 = vst.msk [vmem:[%s479 + $0x38] sm:$0xff] %vm428, %v325
        %488 = vst.msk [vmem:[%s479 + $0x40] sm:$0xff] %vm428, %v326
        %489 = vst.msk [vmem:[%s479 + $0x48] sm:$0xff] %vm428, %v327
        %490 = vst.msk [vmem:[%s479 + $0x50] sm:$0xff] %vm428, %v328
        %491 = vst.msk [vmem:[%s479 + $0x58] sm:$0xff] %vm428, %v329
        %492 = vst.msk [vmem:[%s479 + $0x60] sm:$0xff] %vm428, %v330
        %493 = vst.msk [vmem:[%s479 + $0x68] sm:$0xff] %vm428, %v331
        %494 = vst.msk [vmem:[%s479 + $0x70] sm:$0xff] %vm428, %v332
        %495 = vst.msk [vmem:[%s479 + $0x78] sm:$0xff] %vm428, %v333
        %496 = vst.msk [vmem:[%s479 + $0x80] sm:$0xff] %vm428, %v334
        %497 = vst.msk [vmem:[%s479 + $0x88] sm:$0xff] %vm428, %v335
        %498 = vst.msk [vmem:[%s479 + $0x90] sm:$0xff] %vm428, %v336
        %499 = vst.msk [vmem:[%s479 + $0x98] sm:$0xff] %vm428, %v337
        %500 = vst.msk [vmem:[%s479 + $0xa0] sm:$0xff] %vm428, %v338
        %501 = vst.msk [vmem:[%s479 + $0xa8] sm:$0xff] %vm428, %v339
        %502 = vst.msk [vmem:[%s479 + $0xb0] sm:$0xff] %vm428, %v340
        %503 = vst.msk [vmem:[%s479 + $0xb8] sm:$0xff] %vm428, %v341
        %504 = vst.msk [vmem:[%s479 + $0xc0] sm:$0xff] %vm428, %v342
        %505 = vst.msk [vmem:[%s479 + $0xc8] sm:$0xff] %vm428, %v343
        %506 = vst.msk [vmem:[%s479 + $0xd0] sm:$0xff] %vm428, %v344
        %507 = vst.msk [vmem:[%s479 + $0xd8] sm:$0xff] %vm428, %v345
        %508 = vst.msk [vmem:[%s479 + $0xe0] sm:$0xff] %vm428, %v346
        %509 = vst.msk [vmem:[%s479 + $0xe8] sm:$0xff] %vm428, %v347
        %510 = vst.msk [vmem:[%s479 + $0xf0] sm:$0xff] %vm428, %v348
        %511 = vst.msk [vmem:[%s479 + $0xf8] sm:$0xff] %vm428, %v349
        %v512 = vld [vmem:[#allocation3] sm:$0xff]
        %v513 = vld [vmem:[#allocation3 + $0x8] sm:$0xff]
        %v514 = vld [vmem:[#allocation3 + $0x10] sm:$0xff]
        %v515 = vld [vmem:[#allocation3 + $0x18] sm:$0xff]
        %v516 = vld [vmem:[#allocation3 + $0x20] sm:$0xff]
        %v517 = vld [vmem:[#allocation3 + $0x28] sm:$0xff]
        %v518 = vld [vmem:[#allocation3 + $0x30] sm:$0xff]
        %v519 = vld [vmem:[#allocation3 + $0x38] sm:$0xff]
        %v520 = vld [vmem:[#allocation3 + $0x40] sm:$0xff]
        %v521 = vld [vmem:[#allocation3 + $0x48] sm:$0xff]
        %v522 = vld [vmem:[#allocation3 + $0x50] sm:$0xff]
        %v523 = vld [vmem:[#allocation3 + $0x58] sm:$0xff]
        %v524 = vld [vmem:[#allocation3 + $0x60] sm:$0xff]
        %v525 = vld [vmem:[#allocation3 + $0x68] sm:$0xff]
        %v526 = vld [vmem:[#allocation3 + $0x70] sm:$0xff]
        %v527 = vld [vmem:[#allocation3 + $0x78] sm:$0xff]
        %v528 = vld [vmem:[#allocation3 + $0x80] sm:$0xff]
        %v529 = vld [vmem:[#allocation3 + $0x88] sm:$0xff]
        %v530 = vld [vmem:[#allocation3 + $0x90] sm:$0xff]
        %v531 = vld [vmem:[#allocation3 + $0x98] sm:$0xff]
        %v532 = vld [vmem:[#allocation3 + $0xa0] sm:$0xff]
        %v533 = vld [vmem:[#allocation3 + $0xa8] sm:$0xff]
        %v534 = vld [vmem:[#allocation3 + $0xb0] sm:$0xff]
        %v535 = vld [vmem:[#allocation3 + $0xb8] sm:$0xff]
        %v536 = vld [vmem:[#allocation3 + $0xc0] sm:$0xff]
        %v537 = vld [vmem:[#allocation3 + $0xc8] sm:$0xff]
        %v538 = vld [vmem:[#allocation3 + $0xd0] sm:$0xff]
        %v539 = vld [vmem:[#allocation3 + $0xd8] sm:$0xff]
        %v540 = vld [vmem:[#allocation3 + $0xe0] sm:$0xff]
        %v541 = vld [vmem:[#allocation3 + $0xe8] sm:$0xff]
        %v542 = vld [vmem:[#allocation3 + $0xf0] sm:$0xff]
        %v543 = vld [vmem:[#allocation3 + $0xf8] sm:$0xff]
        %v544 = vld [vmem:[#allocation2] sm:$0xff]
        %v545 = vld [vmem:[#allocation2 + $0x8] sm:$0xff]
        %v546 = vld [vmem:[#allocation2 + $0x10] sm:$0xff]
        %v547 = vld [vmem:[#allocation2 + $0x18] sm:$0xff]
        %v548 = vld [vmem:[#allocation2 + $0x20] sm:$0xff]
        %v549 = vld [vmem:[#allocation2 + $0x28] sm:$0xff]
        %v550 = vld [vmem:[#allocation2 + $0x30] sm:$0xff]
        %v551 = vld [vmem:[#allocation2 + $0x38] sm:$0xff]
        %v552 = vld [vmem:[#allocation2 + $0x40] sm:$0xff]
        %v553 = vld [vmem:[#allocation2 + $0x48] sm:$0xff]
        %v554 = vld [vmem:[#allocation2 + $0x50] sm:$0xff]
        %v555 = vld [vmem:[#allocation2 + $0x58] sm:$0xff]
        %v556 = vld [vmem:[#allocation2 + $0x60] sm:$0xff]
        %v557 = vld [vmem:[#allocation2 + $0x68] sm:$0xff]
        %v558 = vld [vmem:[#allocation2 + $0x70] sm:$0xff]
        %v559 = vld [vmem:[#allocation2 + $0x78] sm:$0xff]
        %v560 = vld [vmem:[#allocation2 + $0x80] sm:$0xff]
        %v561 = vld [vmem:[#allocation2 + $0x88] sm:$0xff]
        %v562 = vld [vmem:[#allocation2 + $0x90] sm:$0xff]
        %v563 = vld [vmem:[#allocation2 + $0x98] sm:$0xff]
        %v564 = vld [vmem:[#allocation2 + $0xa0] sm:$0xff]
        %v565 = vld [vmem:[#allocation2 + $0xa8] sm:$0xff]
        %v566 = vld [vmem:[#allocation2 + $0xb0] sm:$0xff]
        %v567 = vld [vmem:[#allocation2 + $0xb8] sm:$0xff]
        %v568 = vld [vmem:[#allocation2 + $0xc0] sm:$0xff]
        %v569 = vld [vmem:[#allocation2 + $0xc8] sm:$0xff]
        %v570 = vld [vmem:[#allocation2 + $0xd0] sm:$0xff]
        %v571 = vld [vmem:[#allocation2 + $0xd8] sm:$0xff]
        %v572 = vld [vmem:[#allocation2 + $0xe0] sm:$0xff]
        %v573 = vld [vmem:[#allocation2 + $0xe8] sm:$0xff]
        %v574 = vld [vmem:[#allocation2 + $0xf0] sm:$0xff]
        %v575 = vld [vmem:[#allocation2 + $0xf8] sm:$0xff]
        %v576 = vlaneseq
        %v577 = vshrl.u32 %v576, 7
        %v578 = vsub.s32 0, %v577
        %v579 = vrot.slane %v465, %v578
        %v580 = vmul.f32 %v579, %v544
        %v581 = vmul.f32 %v579, %v545
        %v582 = vmul.f32 %v579, %v546
        %v583 = vmul.f32 %v579, %v547
        %v584 = vmul.f32 %v579, %v548
        %v585 = vmul.f32 %v579, %v549
        %v586 = vmul.f32 %v579, %v550
        %v587 = vmul.f32 %v579, %v551
        %v588 = vmul.f32 %v579, %v552
        %v589 = vmul.f32 %v579, %v553
        %v590 = vmul.f32 %v579, %v554
        %v591 = vmul.f32 %v579, %v555
        %v592 = vmul.f32 %v579, %v556
        %v593 = vmul.f32 %v579, %v557
        %v594 = vmul.f32 %v579, %v558
        %v595 = vmul.f32 %v579, %v559
        %v596 = vmul.f32 %v579, %v560
        %v597 = vmul.f32 %v579, %v561
        %v598 = vmul.f32 %v579, %v562
        %v599 = vmul.f32 %v579, %v563
        %v600 = vmul.f32 %v579, %v564
        %v601 = vmul.f32 %v579, %v565
        %v602 = vmul.f32 %v579, %v566
        %v603 = vmul.f32 %v579, %v567
        %v604 = vmul.f32 %v579, %v568
        %v605 = vmul.f32 %v579, %v569
        %v606 = vmul.f32 %v579, %v570
        %v607 = vmul.f32 %v579, %v571
        %v608 = vmul.f32 %v579, %v572
        %v609 = vmul.f32 %v579, %v573
        %v610 = vmul.f32 %v579, %v574
        %v611 = vmul.f32 %v579, %v575
        %v612 = vadd.f32 %v512, %v580
        %v613 = vadd.f32 %v513, %v581
        %v614 = vadd.f32 %v514, %v582
        %v615 = vadd.f32 %v515, %v583
        %v616 = vadd.f32 %v516, %v584
        %v617 = vadd.f32 %v517, %v585
        %v618 = vadd.f32 %v518, %v586
        %v619 = vadd.f32 %v519, %v587
        %v620 = vadd.f32 %v520, %v588
        %v621 = vadd.f32 %v521, %v589
        %v622 = vadd.f32 %v522, %v590
        %v623 = vadd.f32 %v523, %v591
        %v624 = vadd.f32 %v524, %v592
        %v625 = vadd.f32 %v525, %v593
        %v626 = vadd.f32 %v526, %v594
        %v627 = vadd.f32 %v527, %v595
        %v628 = vadd.f32 %v528, %v596
        %v629 = vadd.f32 %v529, %v597
        %v630 = vadd.f32 %v530, %v598
        %v631 = vadd.f32 %v531, %v599
        %v632 = vadd.f32 %v532, %v600
        %v633 = vadd.f32 %v533, %v601
        %v634 = vadd.f32 %v534, %v602
        %v635 = vadd.f32 %v535, %v603
        %v636 = vadd.f32 %v536, %v604
        %v637 = vadd.f32 %v537, %v605
        %v638 = vadd.f32 %v538, %v606
        %v639 = vadd.f32 %v539, %v607
        %v640 = vadd.f32 %v540, %v608
        %v641 = vadd.f32 %v541, %v609
        %v642 = vadd.f32 %v542, %v610
        %v643 = vadd.f32 %v543, %v611
        %s644 = scalar_lea.vmem [#allocation2], 16
        %v645 = vld [vmem:[%s644] sm:$0xff]
        %v646 = vld [vmem:[%s644 + $0x8] sm:$0xff]
        %v647 = vld [vmem:[%s644 + $0x10] sm:$0xff]
        %v648 = vld [vmem:[%s644 + $0x18] sm:$0xff]
        %v649 = vld [vmem:[%s644 + $0x20] sm:$0xff]
        %v650 = vld [vmem:[%s644 + $0x28] sm:$0xff]
        %v651 = vld [vmem:[%s644 + $0x30] sm:$0xff]
        %v652 = vld [vmem:[%s644 + $0x38] sm:$0xff]
        %v653 = vld [vmem:[%s644 + $0x40] sm:$0xff]
        %v654 = vld [vmem:[%s644 + $0x48] sm:$0xff]
        %v655 = vld [vmem:[%s644 + $0x50] sm:$0xff]
        %v656 = vld [vmem:[%s644 + $0x58] sm:$0xff]
        %v657 = vld [vmem:[%s644 + $0x60] sm:$0xff]
        %v658 = vld [vmem:[%s644 + $0x68] sm:$0xff]
        %v659 = vld [vmem:[%s644 + $0x70] sm:$0xff]
        %v660 = vld [vmem:[%s644 + $0x78] sm:$0xff]
        %v661 = vld [vmem:[%s644 + $0x80] sm:$0xff]
        %v662 = vld [vmem:[%s644 + $0x88] sm:$0xff]
        %v663 = vld [vmem:[%s644 + $0x90] sm:$0xff]
        %v664 = vld [vmem:[%s644 + $0x98] sm:$0xff]
        %v665 = vld [vmem:[%s644 + $0xa0] sm:$0xff]
        %v666 = vld [vmem:[%s644 + $0xa8] sm:$0xff]
        %v667 = vld [vmem:[%s644 + $0xb0] sm:$0xff]
        %v668 = vld [vmem:[%s644 + $0xb8] sm:$0xff]
        %v669 = vld [vmem:[%s644 + $0xc0] sm:$0xff]
        %v670 = vld [vmem:[%s644 + $0xc8] sm:$0xff]
        %v671 = vld [vmem:[%s644 + $0xd0] sm:$0xff]
        %v672 = vld [vmem:[%s644 + $0xd8] sm:$0xff]
        %v673 = vld [vmem:[%s644 + $0xe0] sm:$0xff]
        %v674 = vld [vmem:[%s644 + $0xe8] sm:$0xff]
        %v675 = vld [vmem:[%s644 + $0xf0] sm:$0xff]
        %v676 = vld [vmem:[%s644 + $0xf8] sm:$0xff]
        %v677 = vlaneseq
        %v678 = vshrl.u32 %v677, 7
        %v679 = vsub.s32 1, %v678
        %v680 = vrot.slane %v465, %v679
        %v681 = vmul.f32 %v680, %v645
        %v682 = vmul.f32 %v680, %v646
        %v683 = vmul.f32 %v680, %v647
        %v684 = vmul.f32 %v680, %v648
        %v685 = vmul.f32 %v680, %v649
        %v686 = vmul.f32 %v680, %v650
        %v687 = vmul.f32 %v680, %v651
        %v688 = vmul.f32 %v680, %v652
        %v689 = vmul.f32 %v680, %v653
        %v690 = vmul.f32 %v680, %v654
        %v691 = vmul.f32 %v680, %v655
        %v692 = vmul.f32 %v680, %v656
        %v693 = vmul.f32 %v680, %v657
        %v694 = vmul.f32 %v680, %v658
        %v695 = vmul.f32 %v680, %v659
        %v696 = vmul.f32 %v680, %v660
        %v697 = vmul.f32 %v680, %v661
        %v698 = vmul.f32 %v680, %v662
        %v699 = vmul.f32 %v680, %v663
        %v700 = vmul.f32 %v680, %v664
        %v701 = vmul.f32 %v680, %v665
        %v702 = vmul.f32 %v680, %v666
        %v703 = vmul.f32 %v680, %v667
        %v704 = vmul.f32 %v680, %v668
        %v705 = vmul.f32 %v680, %v669
        %v706 = vmul.f32 %v680, %v670
        %v707 = vmul.f32 %v680, %v671
        %v708 = vmul.f32 %v680, %v672
        %v709 = vmul.f32 %v680, %v673
        %v710 = vmul.f32 %v680, %v674
        %v711 = vmul.f32 %v680, %v675
        %v712 = vmul.f32 %v680, %v676
        %v713 = vadd.f32 %v612, %v681
        %v714 = vadd.f32 %v613, %v682
        %v715 = vadd.f32 %v614, %v683
        %v716 = vadd.f32 %v615, %v684
        %v717 = vadd.f32 %v616, %v685
        %v718 = vadd.f32 %v617, %v686
        %v719 = vadd.f32 %v618, %v687
        %v720 = vadd.f32 %v619, %v688
        %v721 = vadd.f32 %v620, %v689
        %v722 = vadd.f32 %v621, %v690
        %v723 = vadd.f32 %v622, %v691
        %v724 = vadd.f32 %v623, %v692
        %v725 = vadd.f32 %v624, %v693
        %v726 = vadd.f32 %v625, %v694
        %v727 = vadd.f32 %v626, %v695
        %v728 = vadd.f32 %v627, %v696
        %v729 = vadd.f32 %v628, %v697
        %v730 = vadd.f32 %v629, %v698
        %v731 = vadd.f32 %v630, %v699
        %v732 = vadd.f32 %v631, %v700
        %v733 = vadd.f32 %v632, %v701
        %v734 = vadd.f32 %v633, %v702
        %v735 = vadd.f32 %v634, %v703
        %v736 = vadd.f32 %v635, %v704
        %v737 = vadd.f32 %v636, %v705
        %v738 = vadd.f32 %v637, %v706
        %v739 = vadd.f32 %v638, %v707
        %v740 = vadd.f32 %v639, %v708
        %v741 = vadd.f32 %v640, %v709
        %v742 = vadd.f32 %v641, %v710
        %v743 = vadd.f32 %v642, %v711
        %v744 = vadd.f32 %v643, %v712
        %s745 = scalar_lea.vmem [#allocation2], 32
        %v746 = vld [vmem:[%s745] sm:$0xff]
        %v747 = vld [vmem:[%s745 + $0x8] sm:$0xff]
        %v748 = vld [vmem:[%s745 + $0x10] sm:$0xff]
        %v749 = vld [vmem:[%s745 + $0x18] sm:$0xff]
        %v750 = vld [vmem:[%s745 + $0x20] sm:$0xff]
        %v751 = vld [vmem:[%s745 + $0x28] sm:$0xff]
        %v752 = vld [vmem:[%s745 + $0x30] sm:$0xff]
        %v753 = vld [vmem:[%s745 + $0x38] sm:$0xff]
        %v754 = vld [vmem:[%s745 + $0x40] sm:$0xff]
        %v755 = vld [vmem:[%s745 + $0x48] sm:$0xff]
        %v756 = vld [vmem:[%s745 + $0x50] sm:$0xff]
        %v757 = vld [vmem:[%s745 + $0x58] sm:$0xff]
        %v758 = vld [vmem:[%s745 + $0x60] sm:$0xff]
        %v759 = vld [vmem:[%s745 + $0x68] sm:$0xff]
        %v760 = vld [vmem:[%s745 + $0x70] sm:$0xff]
        %v761 = vld [vmem:[%s745 + $0x78] sm:$0xff]
        %v762 = vld [vmem:[%s745 + $0x80] sm:$0xff]
        %v763 = vld [vmem:[%s745 + $0x88] sm:$0xff]
        %v764 = vld [vmem:[%s745 + $0x90] sm:$0xff]
        %v765 = vld [vmem:[%s745 + $0x98] sm:$0xff]
        %v766 = vld [vmem:[%s745 + $0xa0] sm:$0xff]
        %v767 = vld [vmem:[%s745 + $0xa8] sm:$0xff]
        %v768 = vld [vmem:[%s745 + $0xb0] sm:$0xff]
        %v769 = vld [vmem:[%s745 + $0xb8] sm:$0xff]
        %v770 = vld [vmem:[%s745 + $0xc0] sm:$0xff]
        %v771 = vld [vmem:[%s745 + $0xc8] sm:$0xff]
        %v772 = vld [vmem:[%s745 + $0xd0] sm:$0xff]
        %v773 = vld [vmem:[%s745 + $0xd8] sm:$0xff]
        %v774 = vld [vmem:[%s745 + $0xe0] sm:$0xff]
        %v775 = vld [vmem:[%s745 + $0xe8] sm:$0xff]
        %v776 = vld [vmem:[%s745 + $0xf0] sm:$0xff]
        %v777 = vld [vmem:[%s745 + $0xf8] sm:$0xff]
        %v778 = vlaneseq
        %v779 = vshrl.u32 %v778, 7
        %v780 = vsub.s32 2, %v779
        %v781 = vrot.slane %v465, %v780
        %v782 = vmul.f32 %v781, %v746
        %v783 = vmul.f32 %v781, %v747
        %v784 = vmul.f32 %v781, %v748
        %v785 = vmul.f32 %v781, %v749
        %v786 = vmul.f32 %v781, %v750
        %v787 = vmul.f32 %v781, %v751
        %v788 = vmul.f32 %v781, %v752
        %v789 = vmul.f32 %v781, %v753
        %v790 = vmul.f32 %v781, %v754
        %v791 = vmul.f32 %v781, %v755
        %v792 = vmul.f32 %v781, %v756
        %v793 = vmul.f32 %v781, %v757
        %v794 = vmul.f32 %v781, %v758
        %v795 = vmul.f32 %v781, %v759
        %v796 = vmul.f32 %v781, %v760
        %v797 = vmul.f32 %v781, %v761
        %v798 = vmul.f32 %v781, %v762
        %v799 = vmul.f32 %v781, %v763
        %v800 = vmul.f32 %v781, %v764
        %v801 = vmul.f32 %v781, %v765
        %v802 = vmul.f32 %v781, %v766
        %v803 = vmul.f32 %v781, %v767
        %v804 = vmul.f32 %v781, %v768
        %v805 = vmul.f32 %v781, %v769
        %v806 = vmul.f32 %v781, %v770
        %v807 = vmul.f32 %v781, %v771
        %v808 = vmul.f32 %v781, %v772
        %v809 = vmul.f32 %v781, %v773
        %v810 = vmul.f32 %v781, %v774
        %v811 = vmul.f32 %v781, %v775
        %v812 = vmul.f32 %v781, %v776
        %v813 = vmul.f32 %v781, %v777
        %v814 = vadd.f32 %v713, %v782
        %v815 = vadd.f32 %v714, %v783
        %v816 = vadd.f32 %v715, %v784
        %v817 = vadd.f32 %v716, %v785
        %v818 = vadd.f32 %v717, %v786
        %v819 = vadd.f32 %v718, %v787
        %v820 = vadd.f32 %v719, %v788
        %v821 = vadd.f32 %v720, %v789
        %v822 = vadd.f32 %v721, %v790
        %v823 = vadd.f32 %v722, %v791
        %v824 = vadd.f32 %v723, %v792
        %v825 = vadd.f32 %v724, %v793
        %v826 = vadd.f32 %v725, %v794
        %v827 = vadd.f32 %v726, %v795
        %v828 = vadd.f32 %v727, %v796
        %v829 = vadd.f32 %v728, %v797
        %v830 = vadd.f32 %v729, %v798
        %v831 = vadd.f32 %v730, %v799
        %v832 = vadd.f32 %v731, %v800
        %v833 = vadd.f32 %v732, %v801
        %v834 = vadd.f32 %v733, %v802
        %v835 = vadd.f32 %v734, %v803
        %v836 = vadd.f32 %v735, %v804
        %v837 = vadd.f32 %v736, %v805
        %v838 = vadd.f32 %v737, %v806
        %v839 = vadd.f32 %v738, %v807
        %v840 = vadd.f32 %v739, %v808
        %v841 = vadd.f32 %v740, %v809
        %v842 = vadd.f32 %v741, %v810
        %v843 = vadd.f32 %v742, %v811
        %v844 = vadd.f32 %v743, %v812
        %v845 = vadd.f32 %v744, %v813
        %v846 = vlaneseq
        %v847 = vshrl.u32 %v846, 7
        %v848 = vsub.s32 3, %v847
        %v849 = vrot.slane %v465, %v848
        %v850 = vmul.f32 %v849, %v318
        %v851 = vmul.f32 %v849, %v319
        %v852 = vmul.f32 %v849, %v320
        %v853 = vmul.f32 %v849, %v321
        %v854 = vmul.f32 %v849, %v322
        %v855 = vmul.f32 %v849, %v323
        %v856 = vmul.f32 %v849, %v324
        %v857 = vmul.f32 %v849, %v325
        %v858 = vmul.f32 %v849, %v326
        %v859 = vmul.f32 %v849, %v327
        %v860 = vmul.f32 %v849, %v328
        %v861 = vmul.f32 %v849, %v329
        %v862 = vmul.f32 %v849, %v330
        %v863 = vmul.f32 %v849, %v331
        %v864 = vmul.f32 %v849, %v332
        %v865 = vmul.f32 %v849, %v333
        %v866 = vmul.f32 %v849, %v334
        %v867 = vmul.f32 %v849, %v335
        %v868 = vmul.f32 %v849, %v336
        %v869 = vmul.f32 %v849, %v337
        %v870 = vmul.f32 %v849, %v338
        %v871 = vmul.f32 %v849, %v339
        %v872 = vmul.f32 %v849, %v340
        %v873 = vmul.f32 %v849, %v341
        %v874 = vmul.f32 %v849, %v342
        %v875 = vmul.f32 %v849, %v343
        %v876 = vmul.f32 %v849, %v344
        %v877 = vmul.f32 %v849, %v345
        %v878 = vmul.f32 %v849, %v346
        %v879 = vmul.f32 %v849, %v347
        %v880 = vmul.f32 %v849, %v348
        %v881 = vmul.f32 %v849, %v349
        %v882 = vadd.f32 %v814, %v850
        %v883 = vadd.f32 %v815, %v851
        %v884 = vadd.f32 %v816, %v852
        %v885 = vadd.f32 %v817, %v853
        %v886 = vadd.f32 %v818, %v854
        %v887 = vadd.f32 %v819, %v855
        %v888 = vadd.f32 %v820, %v856
        %v889 = vadd.f32 %v821, %v857
        %v890 = vadd.f32 %v822, %v858
        %v891 = vadd.f32 %v823, %v859
        %v892 = vadd.f32 %v824, %v860
        %v893 = vadd.f32 %v825, %v861
        %v894 = vadd.f32 %v826, %v862
        %v895 = vadd.f32 %v827, %v863
        %v896 = vadd.f32 %v828, %v864
        %v897 = vadd.f32 %v829, %v865
        %v898 = vadd.f32 %v830, %v866
        %v899 = vadd.f32 %v831, %v867
        %v900 = vadd.f32 %v832, %v868
        %v901 = vadd.f32 %v833, %v869
        %v902 = vadd.f32 %v834, %v870
        %v903 = vadd.f32 %v835, %v871
        %v904 = vadd.f32 %v836, %v872
        %v905 = vadd.f32 %v837, %v873
        %v906 = vadd.f32 %v838, %v874
        %v907 = vadd.f32 %v839, %v875
        %v908 = vadd.f32 %v840, %v876
        %v909 = vadd.f32 %v841, %v877
        %v910 = vadd.f32 %v842, %v878
        %v911 = vadd.f32 %v843, %v879
        %v912 = vadd.f32 %v844, %v880
        %v913 = vadd.f32 %v845, %v881
        %s914 = scalar_lea.vmem [#allocation2], 64
        %v915 = vld [vmem:[%s914] sm:$0xff]
        %v916 = vld [vmem:[%s914 + $0x8] sm:$0xff]
        %v917 = vld [vmem:[%s914 + $0x10] sm:$0xff]
        %v918 = vld [vmem:[%s914 + $0x18] sm:$0xff]
        %v919 = vld [vmem:[%s914 + $0x20] sm:$0xff]
        %v920 = vld [vmem:[%s914 + $0x28] sm:$0xff]
        %v921 = vld [vmem:[%s914 + $0x30] sm:$0xff]
        %v922 = vld [vmem:[%s914 + $0x38] sm:$0xff]
        %v923 = vld [vmem:[%s914 + $0x40] sm:$0xff]
        %v924 = vld [vmem:[%s914 + $0x48] sm:$0xff]
        %v925 = vld [vmem:[%s914 + $0x50] sm:$0xff]
        %v926 = vld [vmem:[%s914 + $0x58] sm:$0xff]
        %v927 = vld [vmem:[%s914 + $0x60] sm:$0xff]
        %v928 = vld [vmem:[%s914 + $0x68] sm:$0xff]
        %v929 = vld [vmem:[%s914 + $0x70] sm:$0xff]
        %v930 = vld [vmem:[%s914 + $0x78] sm:$0xff]
        %v931 = vld [vmem:[%s914 + $0x80] sm:$0xff]
        %v932 = vld [vmem:[%s914 + $0x88] sm:$0xff]
        %v933 = vld [vmem:[%s914 + $0x90] sm:$0xff]
        %v934 = vld [vmem:[%s914 + $0x98] sm:$0xff]
        %v935 = vld [vmem:[%s914 + $0xa0] sm:$0xff]
        %v936 = vld [vmem:[%s914 + $0xa8] sm:$0xff]
        %v937 = vld [vmem:[%s914 + $0xb0] sm:$0xff]
        %v938 = vld [vmem:[%s914 + $0xb8] sm:$0xff]
        %v939 = vld [vmem:[%s914 + $0xc0] sm:$0xff]
        %v940 = vld [vmem:[%s914 + $0xc8] sm:$0xff]
        %v941 = vld [vmem:[%s914 + $0xd0] sm:$0xff]
        %v942 = vld [vmem:[%s914 + $0xd8] sm:$0xff]
        %v943 = vld [vmem:[%s914 + $0xe0] sm:$0xff]
        %v944 = vld [vmem:[%s914 + $0xe8] sm:$0xff]
        %v945 = vld [vmem:[%s914 + $0xf0] sm:$0xff]
        %v946 = vld [vmem:[%s914 + $0xf8] sm:$0xff]
        %v947 = vlaneseq
        %v948 = vshrl.u32 %v947, 7
        %v949 = vsub.s32 4, %v948
        %v950 = vrot.slane %v465, %v949
        %v951 = vmul.f32 %v950, %v915
        %v952 = vmul.f32 %v950, %v916
        %v953 = vmul.f32 %v950, %v917
        %v954 = vmul.f32 %v950, %v918
        %v955 = vmul.f32 %v950, %v919
        %v956 = vmul.f32 %v950, %v920
        %v957 = vmul.f32 %v950, %v921
        %v958 = vmul.f32 %v950, %v922
        %v959 = vmul.f32 %v950, %v923
        %v960 = vmul.f32 %v950, %v924
        %v961 = vmul.f32 %v950, %v925
        %v962 = vmul.f32 %v950, %v926
        %v963 = vmul.f32 %v950, %v927
        %v964 = vmul.f32 %v950, %v928
        %v965 = vmul.f32 %v950, %v929
        %v966 = vmul.f32 %v950, %v930
        %v967 = vmul.f32 %v950, %v931
        %v968 = vmul.f32 %v950, %v932
        %v969 = vmul.f32 %v950, %v933
        %v970 = vmul.f32 %v950, %v934
        %v971 = vmul.f32 %v950, %v935
        %v972 = vmul.f32 %v950, %v936
        %v973 = vmul.f32 %v950, %v937
        %v974 = vmul.f32 %v950, %v938
        %v975 = vmul.f32 %v950, %v939
        %v976 = vmul.f32 %v950, %v940
        %v977 = vmul.f32 %v950, %v941
        %v978 = vmul.f32 %v950, %v942
        %v979 = vmul.f32 %v950, %v943
        %v980 = vmul.f32 %v950, %v944
        %v981 = vmul.f32 %v950, %v945
        %v982 = vmul.f32 %v950, %v946
        %v983 = vadd.f32 %v882, %v951
        %v984 = vadd.f32 %v883, %v952
        %v985 = vadd.f32 %v884, %v953
        %v986 = vadd.f32 %v885, %v954
        %v987 = vadd.f32 %v886, %v955
        %v988 = vadd.f32 %v887, %v956
        %v989 = vadd.f32 %v888, %v957
        %v990 = vadd.f32 %v889, %v958
        %v991 = vadd.f32 %v890, %v959
        %v992 = vadd.f32 %v891, %v960
        %v993 = vadd.f32 %v892, %v961
        %v994 = vadd.f32 %v893, %v962
        %v995 = vadd.f32 %v894, %v963
        %v996 = vadd.f32 %v895, %v964
        %v997 = vadd.f32 %v896, %v965
        %v998 = vadd.f32 %v897, %v966
        %v999 = vadd.f32 %v898, %v967
        %v1000 = vadd.f32 %v899, %v968
        %v1001 = vadd.f32 %v900, %v969
        %v1002 = vadd.f32 %v901, %v970
        %v1003 = vadd.f32 %v902, %v971
        %v1004 = vadd.f32 %v903, %v972
        %v1005 = vadd.f32 %v904, %v973
        %v1006 = vadd.f32 %v905, %v974
        %v1007 = vadd.f32 %v906, %v975
        %v1008 = vadd.f32 %v907, %v976
        %v1009 = vadd.f32 %v908, %v977
        %v1010 = vadd.f32 %v909, %v978
        %v1011 = vadd.f32 %v910, %v979
        %v1012 = vadd.f32 %v911, %v980
        %v1013 = vadd.f32 %v912, %v981
        %v1014 = vadd.f32 %v913, %v982
        %s1015 = scalar_lea.vmem [#allocation2], 80
        %v1016 = vld [vmem:[%s1015] sm:$0xff]
        %v1017 = vld [vmem:[%s1015 + $0x8] sm:$0xff]
        %v1018 = vld [vmem:[%s1015 + $0x10] sm:$0xff]
        %v1019 = vld [vmem:[%s1015 + $0x18] sm:$0xff]
        %v1020 = vld [vmem:[%s1015 + $0x20] sm:$0xff]
        %v1021 = vld [vmem:[%s1015 + $0x28] sm:$0xff]
        %v1022 = vld [vmem:[%s1015 + $0x30] sm:$0xff]
        %v1023 = vld [vmem:[%s1015 + $0x38] sm:$0xff]
        %v1024 = vld [vmem:[%s1015 + $0x40] sm:$0xff]
        %v1025 = vld [vmem:[%s1015 + $0x48] sm:$0xff]
        %v1026 = vld [vmem:[%s1015 + $0x50] sm:$0xff]
        %v1027 = vld [vmem:[%s1015 + $0x58] sm:$0xff]
        %v1028 = vld [vmem:[%s1015 + $0x60] sm:$0xff]
        %v1029 = vld [vmem:[%s1015 + $0x68] sm:$0xff]
        %v1030 = vld [vmem:[%s1015 + $0x70] sm:$0xff]
        %v1031 = vld [vmem:[%s1015 + $0x78] sm:$0xff]
        %v1032 = vld [vmem:[%s1015 + $0x80] sm:$0xff]
        %v1033 = vld [vmem:[%s1015 + $0x88] sm:$0xff]
        %v1034 = vld [vmem:[%s1015 + $0x90] sm:$0xff]
        %v1035 = vld [vmem:[%s1015 + $0x98] sm:$0xff]
        %v1036 = vld [vmem:[%s1015 + $0xa0] sm:$0xff]
        %v1037 = vld [vmem:[%s1015 + $0xa8] sm:$0xff]
        %v1038 = vld [vmem:[%s1015 + $0xb0] sm:$0xff]
        %v1039 = vld [vmem:[%s1015 + $0xb8] sm:$0xff]
        %v1040 = vld [vmem:[%s1015 + $0xc0] sm:$0xff]
        %v1041 = vld [vmem:[%s1015 + $0xc8] sm:$0xff]
        %v1042 = vld [vmem:[%s1015 + $0xd0] sm:$0xff]
        %v1043 = vld [vmem:[%s1015 + $0xd8] sm:$0xff]
        %v1044 = vld [vmem:[%s1015 + $0xe0] sm:$0xff]
        %v1045 = vld [vmem:[%s1015 + $0xe8] sm:$0xff]
        %v1046 = vld [vmem:[%s1015 + $0xf0] sm:$0xff]
        %v1047 = vld [vmem:[%s1015 + $0xf8] sm:$0xff]
        %v1048 = vlaneseq
        %v1049 = vshrl.u32 %v1048, 7
        %v1050 = vsub.s32 5, %v1049
        %v1051 = vrot.slane %v465, %v1050
        %v1052 = vmul.f32 %v1051, %v1016
        %v1053 = vmul.f32 %v1051, %v1017
        %v1054 = vmul.f32 %v1051, %v1018
        %v1055 = vmul.f32 %v1051, %v1019
        %v1056 = vmul.f32 %v1051, %v1020
        %v1057 = vmul.f32 %v1051, %v1021
        %v1058 = vmul.f32 %v1051, %v1022
        %v1059 = vmul.f32 %v1051, %v1023
        %v1060 = vmul.f32 %v1051, %v1024
        %v1061 = vmul.f32 %v1051, %v1025
        %v1062 = vmul.f32 %v1051, %v1026
        %v1063 = vmul.f32 %v1051, %v1027
        %v1064 = vmul.f32 %v1051, %v1028
        %v1065 = vmul.f32 %v1051, %v1029
        %v1066 = vmul.f32 %v1051, %v1030
        %v1067 = vmul.f32 %v1051, %v1031
        %v1068 = vmul.f32 %v1051, %v1032
        %v1069 = vmul.f32 %v1051, %v1033
        %v1070 = vmul.f32 %v1051, %v1034
        %v1071 = vmul.f32 %v1051, %v1035
        %v1072 = vmul.f32 %v1051, %v1036
        %v1073 = vmul.f32 %v1051, %v1037
        %v1074 = vmul.f32 %v1051, %v1038
        %v1075 = vmul.f32 %v1051, %v1039
        %v1076 = vmul.f32 %v1051, %v1040
        %v1077 = vmul.f32 %v1051, %v1041
        %v1078 = vmul.f32 %v1051, %v1042
        %v1079 = vmul.f32 %v1051, %v1043
        %v1080 = vmul.f32 %v1051, %v1044
        %v1081 = vmul.f32 %v1051, %v1045
        %v1082 = vmul.f32 %v1051, %v1046
        %v1083 = vmul.f32 %v1051, %v1047
        %v1084 = vadd.f32 %v983, %v1052
        %v1085 = vadd.f32 %v984, %v1053
        %v1086 = vadd.f32 %v985, %v1054
        %v1087 = vadd.f32 %v986, %v1055
        %v1088 = vadd.f32 %v987, %v1056
        %v1089 = vadd.f32 %v988, %v1057
        %v1090 = vadd.f32 %v989, %v1058
        %v1091 = vadd.f32 %v990, %v1059
        %v1092 = vadd.f32 %v991, %v1060
        %v1093 = vadd.f32 %v992, %v1061
        %v1094 = vadd.f32 %v993, %v1062
        %v1095 = vadd.f32 %v994, %v1063
        %v1096 = vadd.f32 %v995, %v1064
        %v1097 = vadd.f32 %v996, %v1065
        %v1098 = vadd.f32 %v997, %v1066
        %v1099 = vadd.f32 %v998, %v1067
        %v1100 = vadd.f32 %v999, %v1068
        %v1101 = vadd.f32 %v1000, %v1069
        %v1102 = vadd.f32 %v1001, %v1070
        %v1103 = vadd.f32 %v1002, %v1071
        %v1104 = vadd.f32 %v1003, %v1072
        %v1105 = vadd.f32 %v1004, %v1073
        %v1106 = vadd.f32 %v1005, %v1074
        %v1107 = vadd.f32 %v1006, %v1075
        %v1108 = vadd.f32 %v1007, %v1076
        %v1109 = vadd.f32 %v1008, %v1077
        %v1110 = vadd.f32 %v1009, %v1078
        %v1111 = vadd.f32 %v1010, %v1079
        %v1112 = vadd.f32 %v1011, %v1080
        %v1113 = vadd.f32 %v1012, %v1081
        %v1114 = vadd.f32 %v1013, %v1082
        %v1115 = vadd.f32 %v1014, %v1083
        %s1116 = scalar_lea.vmem [#allocation2], 96
        %v1117 = vld [vmem:[%s1116] sm:$0xff]
        %v1118 = vld [vmem:[%s1116 + $0x8] sm:$0xff]
        %v1119 = vld [vmem:[%s1116 + $0x10] sm:$0xff]
        %v1120 = vld [vmem:[%s1116 + $0x18] sm:$0xff]
        %v1121 = vld [vmem:[%s1116 + $0x20] sm:$0xff]
        %v1122 = vld [vmem:[%s1116 + $0x28] sm:$0xff]
        %v1123 = vld [vmem:[%s1116 + $0x30] sm:$0xff]
        %v1124 = vld [vmem:[%s1116 + $0x38] sm:$0xff]
        %v1125 = vld [vmem:[%s1116 + $0x40] sm:$0xff]
        %v1126 = vld [vmem:[%s1116 + $0x48] sm:$0xff]
        %v1127 = vld [vmem:[%s1116 + $0x50] sm:$0xff]
        %v1128 = vld [vmem:[%s1116 + $0x58] sm:$0xff]
        %v1129 = vld [vmem:[%s1116 + $0x60] sm:$0xff]
        %v1130 = vld [vmem:[%s1116 + $0x68] sm:$0xff]
        %v1131 = vld [vmem:[%s1116 + $0x70] sm:$0xff]
        %v1132 = vld [vmem:[%s1116 + $0x78] sm:$0xff]
        %v1133 = vld [vmem:[%s1116 + $0x80] sm:$0xff]
        %v1134 = vld [vmem:[%s1116 + $0x88] sm:$0xff]
        %v1135 = vld [vmem:[%s1116 + $0x90] sm:$0xff]
        %v1136 = vld [vmem:[%s1116 + $0x98] sm:$0xff]
        %v1137 = vld [vmem:[%s1116 + $0xa0] sm:$0xff]
        %v1138 = vld [vmem:[%s1116 + $0xa8] sm:$0xff]
        %v1139 = vld [vmem:[%s1116 + $0xb0] sm:$0xff]
        %v1140 = vld [vmem:[%s1116 + $0xb8] sm:$0xff]
        %v1141 = vld [vmem:[%s1116 + $0xc0] sm:$0xff]
        %v1142 = vld [vmem:[%s1116 + $0xc8] sm:$0xff]
        %v1143 = vld [vmem:[%s1116 + $0xd0] sm:$0xff]
        %v1144 = vld [vmem:[%s1116 + $0xd8] sm:$0xff]
        %v1145 = vld [vmem:[%s1116 + $0xe0] sm:$0xff]
        %v1146 = vld [vmem:[%s1116 + $0xe8] sm:$0xff]
        %v1147 = vld [vmem:[%s1116 + $0xf0] sm:$0xff]
        %v1148 = vld [vmem:[%s1116 + $0xf8] sm:$0xff]
        %v1149 = vlaneseq
        %v1150 = vshrl.u32 %v1149, 7
        %v1151 = vsub.s32 6, %v1150
        %v1152 = vrot.slane %v465, %v1151
        %v1153 = vmul.f32 %v1152, %v1117
        %v1154 = vmul.f32 %v1152, %v1118
        %v1155 = vmul.f32 %v1152, %v1119
        %v1156 = vmul.f32 %v1152, %v1120
        %v1157 = vmul.f32 %v1152, %v1121
        %v1158 = vmul.f32 %v1152, %v1122
        %v1159 = vmul.f32 %v1152, %v1123
        %v1160 = vmul.f32 %v1152, %v1124
        %v1161 = vmul.f32 %v1152, %v1125
        %v1162 = vmul.f32 %v1152, %v1126
        %v1163 = vmul.f32 %v1152, %v1127
        %v1164 = vmul.f32 %v1152, %v1128
        %v1165 = vmul.f32 %v1152, %v1129
        %v1166 = vmul.f32 %v1152, %v1130
        %v1167 = vmul.f32 %v1152, %v1131
        %v1168 = vmul.f32 %v1152, %v1132
        %v1169 = vmul.f32 %v1152, %v1133
        %v1170 = vmul.f32 %v1152, %v1134
        %v1171 = vmul.f32 %v1152, %v1135
        %v1172 = vmul.f32 %v1152, %v1136
        %v1173 = vmul.f32 %v1152, %v1137
        %v1174 = vmul.f32 %v1152, %v1138
        %v1175 = vmul.f32 %v1152, %v1139
        %v1176 = vmul.f32 %v1152, %v1140
        %v1177 = vmul.f32 %v1152, %v1141
        %v1178 = vmul.f32 %v1152, %v1142
        %v1179 = vmul.f32 %v1152, %v1143
        %v1180 = vmul.f32 %v1152, %v1144
        %v1181 = vmul.f32 %v1152, %v1145
        %v1182 = vmul.f32 %v1152, %v1146
        %v1183 = vmul.f32 %v1152, %v1147
        %v1184 = vmul.f32 %v1152, %v1148
        %v1185 = vadd.f32 %v1084, %v1153
        %v1186 = vadd.f32 %v1085, %v1154
        %v1187 = vadd.f32 %v1086, %v1155
        %v1188 = vadd.f32 %v1087, %v1156
        %v1189 = vadd.f32 %v1088, %v1157
        %v1190 = vadd.f32 %v1089, %v1158
        %v1191 = vadd.f32 %v1090, %v1159
        %v1192 = vadd.f32 %v1091, %v1160
        %v1193 = vadd.f32 %v1092, %v1161
        %v1194 = vadd.f32 %v1093, %v1162
        %v1195 = vadd.f32 %v1094, %v1163
        %v1196 = vadd.f32 %v1095, %v1164
        %v1197 = vadd.f32 %v1096, %v1165
        %v1198 = vadd.f32 %v1097, %v1166
        %v1199 = vadd.f32 %v1098, %v1167
        %v1200 = vadd.f32 %v1099, %v1168
        %v1201 = vadd.f32 %v1100, %v1169
        %v1202 = vadd.f32 %v1101, %v1170
        %v1203 = vadd.f32 %v1102, %v1171
        %v1204 = vadd.f32 %v1103, %v1172
        %v1205 = vadd.f32 %v1104, %v1173
        %v1206 = vadd.f32 %v1105, %v1174
        %v1207 = vadd.f32 %v1106, %v1175
        %v1208 = vadd.f32 %v1107, %v1176
        %v1209 = vadd.f32 %v1108, %v1177
        %v1210 = vadd.f32 %v1109, %v1178
        %v1211 = vadd.f32 %v1110, %v1179
        %v1212 = vadd.f32 %v1111, %v1180
        %v1213 = vadd.f32 %v1112, %v1181
        %v1214 = vadd.f32 %v1113, %v1182
        %v1215 = vadd.f32 %v1114, %v1183
        %v1216 = vadd.f32 %v1115, %v1184
        %1217 = vst.msk [vmem:[#allocation3] sm:$0xff] %vm428, %v1185
        %1218 = vst.msk [vmem:[#allocation3 + $0x8] sm:$0xff] %vm428, %v1186
        %1219 = vst.msk [vmem:[#allocation3 + $0x10] sm:$0xff] %vm428, %v1187
        %1220 = vst.msk [vmem:[#allocation3 + $0x18] sm:$0xff] %vm428, %v1188
        %1221 = vst.msk [vmem:[#allocation3 + $0x20] sm:$0xff] %vm428, %v1189
        %1222 = vst.msk [vmem:[#allocation3 + $0x28] sm:$0xff] %vm428, %v1190
        %1223 = vst.msk [vmem:[#allocation3 + $0x30] sm:$0xff] %vm428, %v1191
        %1224 = vst.msk [vmem:[#allocation3 + $0x38] sm:$0xff] %vm428, %v1192
        %1225 = vst.msk [vmem:[#allocation3 + $0x40] sm:$0xff] %vm428, %v1193
        %1226 = vst.msk [vmem:[#allocation3 + $0x48] sm:$0xff] %vm428, %v1194
        %1227 = vst.msk [vmem:[#allocation3 + $0x50] sm:$0xff] %vm428, %v1195
        %1228 = vst.msk [vmem:[#allocation3 + $0x58] sm:$0xff] %vm428, %v1196
        %1229 = vst.msk [vmem:[#allocation3 + $0x60] sm:$0xff] %vm428, %v1197
        %1230 = vst.msk [vmem:[#allocation3 + $0x68] sm:$0xff] %vm428, %v1198
        %1231 = vst.msk [vmem:[#allocation3 + $0x70] sm:$0xff] %vm428, %v1199
        %1232 = vst.msk [vmem:[#allocation3 + $0x78] sm:$0xff] %vm428, %v1200
        %1233 = vst.msk [vmem:[#allocation3 + $0x80] sm:$0xff] %vm428, %v1201
        %1234 = vst.msk [vmem:[#allocation3 + $0x88] sm:$0xff] %vm428, %v1202
        %1235 = vst.msk [vmem:[#allocation3 + $0x90] sm:$0xff] %vm428, %v1203
        %1236 = vst.msk [vmem:[#allocation3 + $0x98] sm:$0xff] %vm428, %v1204
        %1237 = vst.msk [vmem:[#allocation3 + $0xa0] sm:$0xff] %vm428, %v1205
        %1238 = vst.msk [vmem:[#allocation3 + $0xa8] sm:$0xff] %vm428, %v1206
        %1239 = vst.msk [vmem:[#allocation3 + $0xb0] sm:$0xff] %vm428, %v1207
        %1240 = vst.msk [vmem:[#allocation3 + $0xb8] sm:$0xff] %vm428, %v1208
        %1241 = vst.msk [vmem:[#allocation3 + $0xc0] sm:$0xff] %vm428, %v1209
        %1242 = vst.msk [vmem:[#allocation3 + $0xc8] sm:$0xff] %vm428, %v1210
        %1243 = vst.msk [vmem:[#allocation3 + $0xd0] sm:$0xff] %vm428, %v1211
        %1244 = vst.msk [vmem:[#allocation3 + $0xd8] sm:$0xff] %vm428, %v1212
        %1245 = vst.msk [vmem:[#allocation3 + $0xe0] sm:$0xff] %vm428, %v1213
        %1246 = vst.msk [vmem:[#allocation3 + $0xe8] sm:$0xff] %vm428, %v1214
        %1247 = vst.msk [vmem:[#allocation3 + $0xf0] sm:$0xff] %vm428, %v1215
        %1248 = vst.msk [vmem:[#allocation3 + $0xf8] sm:$0xff] %vm428, %v1216
      $region44: #{tpu_custom_call.1} parent=39 // pred_fallthru
        _
      %p1249 = scmp.ge.s32.totalorder %s21, 0
      // Predicated region
      $region45: #{tpu_custom_call.1} parent=39 // pred_check
        %p1250 = pneg %p1249
      $region46: #{tpu_custom_call.1} parent=39 // pred_check_branch
        %1252 = sbr.rel (%p1250) target = $region48
      $region47: #{tpu_custom_call.1} parent=39 // pred_region
        %v1253 = vld [vmem:[%s303] sm:$0x7f]
        %v1254 = vlaneseq
        %v1255 = vshrl.u32 %v1254, 7
        %v1256 = vadd.s32 %v1255, 8
        %v1257 = vld [vmem:[#allocation3] sm:$0xff]
        %v1258 = vld [vmem:[#allocation3 + $0x8] sm:$0xff]
        %v1259 = vld [vmem:[#allocation3 + $0x10] sm:$0xff]
        %v1260 = vld [vmem:[#allocation3 + $0x18] sm:$0xff]
        %v1261 = vld [vmem:[#allocation3 + $0x20] sm:$0xff]
        %v1262 = vld [vmem:[#allocation3 + $0x28] sm:$0xff]
        %v1263 = vld [vmem:[#allocation3 + $0x30] sm:$0xff]
        %v1264 = vld [vmem:[#allocation3 + $0x38] sm:$0xff]
        %v1265 = vld [vmem:[#allocation3 + $0x40] sm:$0xff]
        %v1266 = vld [vmem:[#allocation3 + $0x48] sm:$0xff]
        %v1267 = vld [vmem:[#allocation3 + $0x50] sm:$0xff]
        %v1268 = vld [vmem:[#allocation3 + $0x58] sm:$0xff]
        %v1269 = vld [vmem:[#allocation3 + $0x60] sm:$0xff]
        %v1270 = vld [vmem:[#allocation3 + $0x68] sm:$0xff]
        %v1271 = vld [vmem:[#allocation3 + $0x70] sm:$0xff]
        %v1272 = vld [vmem:[#allocation3 + $0x78] sm:$0xff]
        %v1273 = vld [vmem:[#allocation3 + $0x80] sm:$0xff]
        %v1274 = vld [vmem:[#allocation3 + $0x88] sm:$0xff]
        %v1275 = vld [vmem:[#allocation3 + $0x90] sm:$0xff]
        %v1276 = vld [vmem:[#allocation3 + $0x98] sm:$0xff]
        %v1277 = vld [vmem:[#allocation3 + $0xa0] sm:$0xff]
        %v1278 = vld [vmem:[#allocation3 + $0xa8] sm:$0xff]
        %v1279 = vld [vmem:[#allocation3 + $0xb0] sm:$0xff]
        %v1280 = vld [vmem:[#allocation3 + $0xb8] sm:$0xff]
        %v1281 = vld [vmem:[#allocation3 + $0xc0] sm:$0xff]
        %v1282 = vld [vmem:[#allocation3 + $0xc8] sm:$0xff]
        %v1283 = vld [vmem:[#allocation3 + $0xd0] sm:$0xff]
        %v1284 = vld [vmem:[#allocation3 + $0xd8] sm:$0xff]
        %v1285 = vld [vmem:[#allocation3 + $0xe0] sm:$0xff]
        %v1286 = vld [vmem:[#allocation3 + $0xe8] sm:$0xff]
        %v1287 = vld [vmem:[#allocation3 + $0xf0] sm:$0xff]
        %v1288 = vld [vmem:[#allocation3 + $0xf8] sm:$0xff]
        %v1289 = vrot.slane %v318, 5
        %v1290 = vrot.slane %v320, 5
        %v1291 = vrot.slane %v322, 5
        %v1292 = vrot.slane %v324, 5
        %v1293 = vrot.slane %v326, 5
        %v1294 = vrot.slane %v328, 5
        %v1295 = vrot.slane %v330, 5
        %v1296 = vrot.slane %v332, 5
        %v1297 = vrot.slane %v334, 5
        %v1298 = vrot.slane %v336, 5
        %v1299 = vrot.slane %v338, 5
        %v1300 = vrot.slane %v340, 5
        %v1301 = vrot.slane %v342, 5
        %v1302 = vrot.slane %v344, 5
        %v1303 = vrot.slane %v346, 5
        %v1304 = vrot.slane %v348, 5
        %v1305 = vrot.slane %v319, 5
        %v1306 = vrot.slane %v321, 5
        %v1307 = vrot.slane %v323, 5
        %v1308 = vrot.slane %v325, 5
        %v1309 = vrot.slane %v327, 5
        %v1310 = vrot.slane %v329, 5
        %v1311 = vrot.slane %v331, 5
        %v1312 = vrot.slane %v333, 5
        %v1313 = vrot.slane %v335, 5
        %v1314 = vrot.slane %v337, 5
        %v1315 = vrot.slane %v339, 5
        %v1316 = vrot.slane %v341, 5
        %v1317 = vrot.slane %v343, 5
        %v1318 = vrot.slane %v345, 5
        %v1319 = vrot.slane %v347, 5
        %v1320 = vrot.slane %v349, 5
        %vm1321 = vcmp.lt.s32.totalorder %v1255, 3
        %v1322 = vsel %vm1321, %v1289, %v1305
        %v1323 = vsel %vm1321, %v1290, %v1306
        %v1324 = vsel %vm1321, %v1291, %v1307
        %v1325 = vsel %vm1321, %v1292, %v1308
        %v1326 = vsel %vm1321, %v1293, %v1309
        %v1327 = vsel %vm1321, %v1294, %v1310
        %v1328 = vsel %vm1321, %v1295, %v1311
        %v1329 = vsel %vm1321, %v1296, %v1312
        %v1330 = vsel %vm1321, %v1297, %v1313
        %v1331 = vsel %vm1321, %v1298, %v1314
        %v1332 = vsel %vm1321, %v1299, %v1315
        %v1333 = vsel %vm1321, %v1300, %v1316
        %v1334 = vsel %vm1321, %v1301, %v1317
        %v1335 = vsel %vm1321, %v1302, %v1318
        %v1336 = vsel %vm1321, %v1303, %v1319
        %v1337 = vsel %vm1321, %v1304, %v1320
        %v1338 = vsel %vm1321, %v1305, %v1289
        %v1339 = vsel %vm1321, %v1306, %v1290
        %v1340 = vsel %vm1321, %v1307, %v1291
        %v1341 = vsel %vm1321, %v1308, %v1292
        %v1342 = vsel %vm1321, %v1309, %v1293
        %v1343 = vsel %vm1321, %v1310, %v1294
        %v1344 = vsel %vm1321, %v1311, %v1295
        %v1345 = vsel %vm1321, %v1312, %v1296
        %v1346 = vsel %vm1321, %v1313, %v1297
        %v1347 = vsel %vm1321, %v1314, %v1298
        %v1348 = vsel %vm1321, %v1315, %v1299
        %v1349 = vsel %vm1321, %v1316, %v1300
        %v1350 = vsel %vm1321, %v1317, %v1301
        %v1351 = vsel %vm1321, %v1318, %v1302
        %v1352 = vsel %vm1321, %v1319, %v1303
        %v1353 = vsel %vm1321, %v1320, %v1304
        %vm1354 = vcmp.ge.s32.totalorder %v1255, 3
        %vm1355 = vcmp.ge.s32.totalorder %v1256, 3
        %vm1356 = vcmp.lt.s32.totalorder %v1255, 16
        %vm1357 = vcmp.lt.s32.totalorder %v1256, 16
        %vm1358 = vmand %vm1354, %vm1356
        %vm1359 = vmand %vm1355, %vm1357
        %v1360 = vsel %vm1358, 1, 0
        %v1361 = vsel %vm1359, 1, 0
        %v1362 = vcvt.s32.f32 %v1360
        %v1363 = vcvt.s32.f32 %v1361
        %v1364 = vlaneseq
        %v1365 = vshrl.u32 %v1364, 7
        %v1366 = vsub.s32 0, %v1365
        %v1367 = vrot.slane %v1253, %v1366
        %v1368 = vmul.f32 %v1367, %v1362
        %v1369 = vmul.f32 %v1367, %v1363
        %v1370 = vmul.f32 %v1368, %v1338
        %v1371 = vmul.f32 %v1369, %v1322
        %v1372 = vmul.f32 %v1368, %v1339
        %v1373 = vmul.f32 %v1369, %v1323
        %v1374 = vmul.f32 %v1368, %v1340
        %v1375 = vmul.f32 %v1369, %v1324
        %v1376 = vmul.f32 %v1368, %v1341
        %v1377 = vmul.f32 %v1369, %v1325
        %v1378 = vmul.f32 %v1368, %v1342
        %v1379 = vmul.f32 %v1369, %v1326
        %v1380 = vmul.f32 %v1368, %v1343
        %v1381 = vmul.f32 %v1369, %v1327
        %v1382 = vmul.f32 %v1368, %v1344
        %v1383 = vmul.f32 %v1369, %v1328
        %v1384 = vmul.f32 %v1368, %v1345
        %v1385 = vmul.f32 %v1369, %v1329
        %v1386 = vmul.f32 %v1368, %v1346
        %v1387 = vmul.f32 %v1369, %v1330
        %v1388 = vmul.f32 %v1368, %v1347
        %v1389 = vmul.f32 %v1369, %v1331
        %v1390 = vmul.f32 %v1368, %v1348
        %v1391 = vmul.f32 %v1369, %v1332
        %v1392 = vmul.f32 %v1368, %v1349
        %v1393 = vmul.f32 %v1369, %v1333
        %v1394 = vmul.f32 %v1368, %v1350
        %v1395 = vmul.f32 %v1369, %v1334
        %v1396 = vmul.f32 %v1368, %v1351
        %v1397 = vmul.f32 %v1369, %v1335
        %v1398 = vmul.f32 %v1368, %v1352
        %v1399 = vmul.f32 %v1369, %v1336
        %v1400 = vmul.f32 %v1368, %v1353
        %v1401 = vmul.f32 %v1369, %v1337
        %v1402 = vadd.f32 %v1257, %v1370
        %v1403 = vadd.f32 %v1258, %v1371
        %v1404 = vadd.f32 %v1259, %v1372
        %v1405 = vadd.f32 %v1260, %v1373
        %v1406 = vadd.f32 %v1261, %v1374
        %v1407 = vadd.f32 %v1262, %v1375
        %v1408 = vadd.f32 %v1263, %v1376
        %v1409 = vadd.f32 %v1264, %v1377
        %v1410 = vadd.f32 %v1265, %v1378
        %v1411 = vadd.f32 %v1266, %v1379
        %v1412 = vadd.f32 %v1267, %v1380
        %v1413 = vadd.f32 %v1268, %v1381
        %v1414 = vadd.f32 %v1269, %v1382
        %v1415 = vadd.f32 %v1270, %v1383
        %v1416 = vadd.f32 %v1271, %v1384
        %v1417 = vadd.f32 %v1272, %v1385
        %v1418 = vadd.f32 %v1273, %v1386
        %v1419 = vadd.f32 %v1274, %v1387
        %v1420 = vadd.f32 %v1275, %v1388
        %v1421 = vadd.f32 %v1276, %v1389
        %v1422 = vadd.f32 %v1277, %v1390
        %v1423 = vadd.f32 %v1278, %v1391
        %v1424 = vadd.f32 %v1279, %v1392
        %v1425 = vadd.f32 %v1280, %v1393
        %v1426 = vadd.f32 %v1281, %v1394
        %v1427 = vadd.f32 %v1282, %v1395
        %v1428 = vadd.f32 %v1283, %v1396
        %v1429 = vadd.f32 %v1284, %v1397
        %v1430 = vadd.f32 %v1285, %v1398
        %v1431 = vadd.f32 %v1286, %v1399
        %v1432 = vadd.f32 %v1287, %v1400
        %v1433 = vadd.f32 %v1288, %v1401
        %v1434 = vrot.slane %v318, 6
        %v1435 = vrot.slane %v320, 6
        %v1436 = vrot.slane %v322, 6
        %v1437 = vrot.slane %v324, 6
        %v1438 = vrot.slane %v326, 6
        %v1439 = vrot.slane %v328, 6
        %v1440 = vrot.slane %v330, 6
        %v1441 = vrot.slane %v332, 6
        %v1442 = vrot.slane %v334, 6
        %v1443 = vrot.slane %v336, 6
        %v1444 = vrot.slane %v338, 6
        %v1445 = vrot.slane %v340, 6
        %v1446 = vrot.slane %v342, 6
        %v1447 = vrot.slane %v344, 6
        %v1448 = vrot.slane %v346, 6
        %v1449 = vrot.slane %v348, 6
        %v1450 = vrot.slane %v319, 6
        %v1451 = vrot.slane %v321, 6
        %v1452 = vrot.slane %v323, 6
        %v1453 = vrot.slane %v325, 6
        %v1454 = vrot.slane %v327, 6
        %v1455 = vrot.slane %v329, 6
        %v1456 = vrot.slane %v331, 6
        %v1457 = vrot.slane %v333, 6
        %v1458 = vrot.slane %v335, 6
        %v1459 = vrot.slane %v337, 6
        %v1460 = vrot.slane %v339, 6
        %v1461 = vrot.slane %v341, 6
        %v1462 = vrot.slane %v343, 6
        %v1463 = vrot.slane %v345, 6
        %v1464 = vrot.slane %v347, 6
        %v1465 = vrot.slane %v349, 6
        %vm1466 = vcmp.lt.s32.totalorder %v1255, 2
        %v1467 = vsel %vm1466, %v1434, %v1450
        %v1468 = vsel %vm1466, %v1435, %v1451
        %v1469 = vsel %vm1466, %v1436, %v1452
        %v1470 = vsel %vm1466, %v1437, %v1453
        %v1471 = vsel %vm1466, %v1438, %v1454
        %v1472 = vsel %vm1466, %v1439, %v1455
        %v1473 = vsel %vm1466, %v1440, %v1456
        %v1474 = vsel %vm1466, %v1441, %v1457
        %v1475 = vsel %vm1466, %v1442, %v1458
        %v1476 = vsel %vm1466, %v1443, %v1459
        %v1477 = vsel %vm1466, %v1444, %v1460
        %v1478 = vsel %vm1466, %v1445, %v1461
        %v1479 = vsel %vm1466, %v1446, %v1462
        %v1480 = vsel %vm1466, %v1447, %v1463
        %v1481 = vsel %vm1466, %v1448, %v1464
        %v1482 = vsel %vm1466, %v1449, %v1465
        %v1483 = vsel %vm1466, %v1450, %v1434
        %v1484 = vsel %vm1466, %v1451, %v1435
        %v1485 = vsel %vm1466, %v1452, %v1436
        %v1486 = vsel %vm1466, %v1453, %v1437
        %v1487 = vsel %vm1466, %v1454, %v1438
        %v1488 = vsel %vm1466, %v1455, %v1439
        %v1489 = vsel %vm1466, %v1456, %v1440
        %v1490 = vsel %vm1466, %v1457, %v1441
        %v1491 = vsel %vm1466, %v1458, %v1442
        %v1492 = vsel %vm1466, %v1459, %v1443
        %v1493 = vsel %vm1466, %v1460, %v1444
        %v1494 = vsel %vm1466, %v1461, %v1445
        %v1495 = vsel %vm1466, %v1462, %v1446
        %v1496 = vsel %vm1466, %v1463, %v1447
        %v1497 = vsel %vm1466, %v1464, %v1448
        %v1498 = vsel %vm1466, %v1465, %v1449
        %vm1499 = vcmp.ge.s32.totalorder %v1255, 2
        %vm1500 = vcmp.ge.s32.totalorder %v1256, 2
        %vm1501 = vmand %vm1499, %vm1356
        %vm1502 = vmand %vm1500, %vm1357
        %v1503 = vsel %vm1501, 1, 0
        %v1504 = vsel %vm1502, 1, 0
        %v1505 = vcvt.s32.f32 %v1503
        %v1506 = vcvt.s32.f32 %v1504
        %v1507 = vlaneseq
        %v1508 = vshrl.u32 %v1507, 7
        %v1509 = vsub.s32 1, %v1508
        %v1510 = vrot.slane %v1253, %v1509
        %v1511 = vmul.f32 %v1510, %v1505
        %v1512 = vmul.f32 %v1510, %v1506
        %v1513 = vmul.f32 %v1511, %v1483
        %v1514 = vmul.f32 %v1512, %v1467
        %v1515 = vmul.f32 %v1511, %v1484
        %v1516 = vmul.f32 %v1512, %v1468
        %v1517 = vmul.f32 %v1511, %v1485
        %v1518 = vmul.f32 %v1512, %v1469
        %v1519 = vmul.f32 %v1511, %v1486
        %v1520 = vmul.f32 %v1512, %v1470
        %v1521 = vmul.f32 %v1511, %v1487
        %v1522 = vmul.f32 %v1512, %v1471
        %v1523 = vmul.f32 %v1511, %v1488
        %v1524 = vmul.f32 %v1512, %v1472
        %v1525 = vmul.f32 %v1511, %v1489
        %v1526 = vmul.f32 %v1512, %v1473
        %v1527 = vmul.f32 %v1511, %v1490
        %v1528 = vmul.f32 %v1512, %v1474
        %v1529 = vmul.f32 %v1511, %v1491
        %v1530 = vmul.f32 %v1512, %v1475
        %v1531 = vmul.f32 %v1511, %v1492
        %v1532 = vmul.f32 %v1512, %v1476
        %v1533 = vmul.f32 %v1511, %v1493
        %v1534 = vmul.f32 %v1512, %v1477
        %v1535 = vmul.f32 %v1511, %v1494
        %v1536 = vmul.f32 %v1512, %v1478
        %v1537 = vmul.f32 %v1511, %v1495
        %v1538 = vmul.f32 %v1512, %v1479
        %v1539 = vmul.f32 %v1511, %v1496
        %v1540 = vmul.f32 %v1512, %v1480
        %v1541 = vmul.f32 %v1511, %v1497
        %v1542 = vmul.f32 %v1512, %v1481
        %v1543 = vmul.f32 %v1511, %v1498
        %v1544 = vmul.f32 %v1512, %v1482
        %v1545 = vadd.f32 %v1402, %v1513
        %v1546 = vadd.f32 %v1403, %v1514
        %v1547 = vadd.f32 %v1404, %v1515
        %v1548 = vadd.f32 %v1405, %v1516
        %v1549 = vadd.f32 %v1406, %v1517
        %v1550 = vadd.f32 %v1407, %v1518
        %v1551 = vadd.f32 %v1408, %v1519
        %v1552 = vadd.f32 %v1409, %v1520
        %v1553 = vadd.f32 %v1410, %v1521
        %v1554 = vadd.f32 %v1411, %v1522
        %v1555 = vadd.f32 %v1412, %v1523
        %v1556 = vadd.f32 %v1413, %v1524
        %v1557 = vadd.f32 %v1414, %v1525
        %v1558 = vadd.f32 %v1415, %v1526
        %v1559 = vadd.f32 %v1416, %v1527
        %v1560 = vadd.f32 %v1417, %v1528
        %v1561 = vadd.f32 %v1418, %v1529
        %v1562 = vadd.f32 %v1419, %v1530
        %v1563 = vadd.f32 %v1420, %v1531
        %v1564 = vadd.f32 %v1421, %v1532
        %v1565 = vadd.f32 %v1422, %v1533
        %v1566 = vadd.f32 %v1423, %v1534
        %v1567 = vadd.f32 %v1424, %v1535
        %v1568 = vadd.f32 %v1425, %v1536
        %v1569 = vadd.f32 %v1426, %v1537
        %v1570 = vadd.f32 %v1427, %v1538
        %v1571 = vadd.f32 %v1428, %v1539
        %v1572 = vadd.f32 %v1429, %v1540
        %v1573 = vadd.f32 %v1430, %v1541
        %v1574 = vadd.f32 %v1431, %v1542
        %v1575 = vadd.f32 %v1432, %v1543
        %v1576 = vadd.f32 %v1433, %v1544
        %v1577 = vrot.slane %v318, 7
        %v1578 = vrot.slane %v320, 7
        %v1579 = vrot.slane %v322, 7
        %v1580 = vrot.slane %v324, 7
        %v1581 = vrot.slane %v326, 7
        %v1582 = vrot.slane %v328, 7
        %v1583 = vrot.slane %v330, 7
        %v1584 = vrot.slane %v332, 7
        %v1585 = vrot.slane %v334, 7
        %v1586 = vrot.slane %v336, 7
        %v1587 = vrot.slane %v338, 7
        %v1588 = vrot.slane %v340, 7
        %v1589 = vrot.slane %v342, 7
        %v1590 = vrot.slane %v344, 7
        %v1591 = vrot.slane %v346, 7
        %v1592 = vrot.slane %v348, 7
        %v1593 = vrot.slane %v319, 7
        %v1594 = vrot.slane %v321, 7
        %v1595 = vrot.slane %v323, 7
        %v1596 = vrot.slane %v325, 7
        %v1597 = vrot.slane %v327, 7
        %v1598 = vrot.slane %v329, 7
        %v1599 = vrot.slane %v331, 7
        %v1600 = vrot.slane %v333, 7
        %v1601 = vrot.slane %v335, 7
        %v1602 = vrot.slane %v337, 7
        %v1603 = vrot.slane %v339, 7
        %v1604 = vrot.slane %v341, 7
        %v1605 = vrot.slane %v343, 7
        %v1606 = vrot.slane %v345, 7
        %v1607 = vrot.slane %v347, 7
        %v1608 = vrot.slane %v349, 7
        %vm1609 = vcmp.lt.s32.totalorder %v1255, 1
        %v1610 = vsel %vm1609, %v1577, %v1593
        %v1611 = vsel %vm1609, %v1578, %v1594
        %v1612 = vsel %vm1609, %v1579, %v1595
        %v1613 = vsel %vm1609, %v1580, %v1596
        %v1614 = vsel %vm1609, %v1581, %v1597
        %v1615 = vsel %vm1609, %v1582, %v1598
        %v1616 = vsel %vm1609, %v1583, %v1599
        %v1617 = vsel %vm1609, %v1584, %v1600
        %v1618 = vsel %vm1609, %v1585, %v1601
        %v1619 = vsel %vm1609, %v1586, %v1602
        %v1620 = vsel %vm1609, %v1587, %v1603
        %v1621 = vsel %vm1609, %v1588, %v1604
        %v1622 = vsel %vm1609, %v1589, %v1605
        %v1623 = vsel %vm1609, %v1590, %v1606
        %v1624 = vsel %vm1609, %v1591, %v1607
        %v1625 = vsel %vm1609, %v1592, %v1608
        %v1626 = vsel %vm1609, %v1593, %v1577
        %v1627 = vsel %vm1609, %v1594, %v1578
        %v1628 = vsel %vm1609, %v1595, %v1579
        %v1629 = vsel %vm1609, %v1596, %v1580
        %v1630 = vsel %vm1609, %v1597, %v1581
        %v1631 = vsel %vm1609, %v1598, %v1582
        %v1632 = vsel %vm1609, %v1599, %v1583
        %v1633 = vsel %vm1609, %v1600, %v1584
        %v1634 = vsel %vm1609, %v1601, %v1585
        %v1635 = vsel %vm1609, %v1602, %v1586
        %v1636 = vsel %vm1609, %v1603, %v1587
        %v1637 = vsel %vm1609, %v1604, %v1588
        %v1638 = vsel %vm1609, %v1605, %v1589
        %v1639 = vsel %vm1609, %v1606, %v1590
        %v1640 = vsel %vm1609, %v1607, %v1591
        %v1641 = vsel %vm1609, %v1608, %v1592
        %vm1642 = vcmp.ge.s32.totalorder %v1255, 1
        %vm1643 = vcmp.ge.s32.totalorder %v1256, 1
        %vm1644 = vmand %vm1642, %vm1356
        %vm1645 = vmand %vm1643, %vm1357
        %v1646 = vsel %vm1644, 1, 0
        %v1647 = vsel %vm1645, 1, 0
        %v1648 = vcvt.s32.f32 %v1646
        %v1649 = vcvt.s32.f32 %v1647
        %v1650 = vlaneseq
        %v1651 = vshrl.u32 %v1650, 7
        %v1652 = vsub.s32 2, %v1651
        %v1653 = vrot.slane %v1253, %v1652
        %v1654 = vmul.f32 %v1653, %v1648
        %v1655 = vmul.f32 %v1653, %v1649
        %v1656 = vmul.f32 %v1654, %v1626
        %v1657 = vmul.f32 %v1655, %v1610
        %v1658 = vmul.f32 %v1654, %v1627
        %v1659 = vmul.f32 %v1655, %v1611
        %v1660 = vmul.f32 %v1654, %v1628
        %v1661 = vmul.f32 %v1655, %v1612
        %v1662 = vmul.f32 %v1654, %v1629
        %v1663 = vmul.f32 %v1655, %v1613
        %v1664 = vmul.f32 %v1654, %v1630
        %v1665 = vmul.f32 %v1655, %v1614
        %v1666 = vmul.f32 %v1654, %v1631
        %v1667 = vmul.f32 %v1655, %v1615
        %v1668 = vmul.f32 %v1654, %v1632
        %v1669 = vmul.f32 %v1655, %v1616
        %v1670 = vmul.f32 %v1654, %v1633
        %v1671 = vmul.f32 %v1655, %v1617
        %v1672 = vmul.f32 %v1654, %v1634
        %v1673 = vmul.f32 %v1655, %v1618
        %v1674 = vmul.f32 %v1654, %v1635
        %v1675 = vmul.f32 %v1655, %v1619
        %v1676 = vmul.f32 %v1654, %v1636
        %v1677 = vmul.f32 %v1655, %v1620
        %v1678 = vmul.f32 %v1654, %v1637
        %v1679 = vmul.f32 %v1655, %v1621
        %v1680 = vmul.f32 %v1654, %v1638
        %v1681 = vmul.f32 %v1655, %v1622
        %v1682 = vmul.f32 %v1654, %v1639
        %v1683 = vmul.f32 %v1655, %v1623
        %v1684 = vmul.f32 %v1654, %v1640
        %v1685 = vmul.f32 %v1655, %v1624
        %v1686 = vmul.f32 %v1654, %v1641
        %v1687 = vmul.f32 %v1655, %v1625
        %v1688 = vadd.f32 %v1545, %v1656
        %v1689 = vadd.f32 %v1546, %v1657
        %v1690 = vadd.f32 %v1547, %v1658
        %v1691 = vadd.f32 %v1548, %v1659
        %v1692 = vadd.f32 %v1549, %v1660
        %v1693 = vadd.f32 %v1550, %v1661
        %v1694 = vadd.f32 %v1551, %v1662
        %v1695 = vadd.f32 %v1552, %v1663
        %v1696 = vadd.f32 %v1553, %v1664
        %v1697 = vadd.f32 %v1554, %v1665
        %v1698 = vadd.f32 %v1555, %v1666
        %v1699 = vadd.f32 %v1556, %v1667
        %v1700 = vadd.f32 %v1557, %v1668
        %v1701 = vadd.f32 %v1558, %v1669
        %v1702 = vadd.f32 %v1559, %v1670
        %v1703 = vadd.f32 %v1560, %v1671
        %v1704 = vadd.f32 %v1561, %v1672
        %v1705 = vadd.f32 %v1562, %v1673
        %v1706 = vadd.f32 %v1563, %v1674
        %v1707 = vadd.f32 %v1564, %v1675
        %v1708 = vadd.f32 %v1565, %v1676
        %v1709 = vadd.f32 %v1566, %v1677
        %v1710 = vadd.f32 %v1567, %v1678
        %v1711 = vadd.f32 %v1568, %v1679
        %v1712 = vadd.f32 %v1569, %v1680
        %v1713 = vadd.f32 %v1570, %v1681
        %v1714 = vadd.f32 %v1571, %v1682
        %v1715 = vadd.f32 %v1572, %v1683
        %v1716 = vadd.f32 %v1573, %v1684
        %v1717 = vadd.f32 %v1574, %v1685
        %v1718 = vadd.f32 %v1575, %v1686
        %v1719 = vadd.f32 %v1576, %v1687
        %v1720 = vlaneseq
        %v1721 = vshrl.u32 %v1720, 7
        %v1722 = vsub.s32 3, %v1721
        %v1723 = vrot.slane %v1253, %v1722
        %v1724 = vmul.f32 %v1723, %v318
        %v1725 = vmul.f32 %v1723, %v319
        %v1726 = vmul.f32 %v1723, %v320
        %v1727 = vmul.f32 %v1723, %v321
        %v1728 = vmul.f32 %v1723, %v322
        %v1729 = vmul.f32 %v1723, %v323
        %v1730 = vmul.f32 %v1723, %v324
        %v1731 = vmul.f32 %v1723, %v325
        %v1732 = vmul.f32 %v1723, %v326
        %v1733 = vmul.f32 %v1723, %v327
        %v1734 = vmul.f32 %v1723, %v328
        %v1735 = vmul.f32 %v1723, %v329
        %v1736 = vmul.f32 %v1723, %v330
        %v1737 = vmul.f32 %v1723, %v331
        %v1738 = vmul.f32 %v1723, %v332
        %v1739 = vmul.f32 %v1723, %v333
        %v1740 = vmul.f32 %v1723, %v334
        %v1741 = vmul.f32 %v1723, %v335
        %v1742 = vmul.f32 %v1723, %v336
        %v1743 = vmul.f32 %v1723, %v337
        %v1744 = vmul.f32 %v1723, %v338
        %v1745 = vmul.f32 %v1723, %v339
        %v1746 = vmul.f32 %v1723, %v340
        %v1747 = vmul.f32 %v1723, %v341
        %v1748 = vmul.f32 %v1723, %v342
        %v1749 = vmul.f32 %v1723, %v343
        %v1750 = vmul.f32 %v1723, %v344
        %v1751 = vmul.f32 %v1723, %v345
        %v1752 = vmul.f32 %v1723, %v346
        %v1753 = vmul.f32 %v1723, %v347
        %v1754 = vmul.f32 %v1723, %v348
        %v1755 = vmul.f32 %v1723, %v349
        %v1756 = vadd.f32 %v1688, %v1724
        %v1757 = vadd.f32 %v1689, %v1725
        %v1758 = vadd.f32 %v1690, %v1726
        %v1759 = vadd.f32 %v1691, %v1727
        %v1760 = vadd.f32 %v1692, %v1728
        %v1761 = vadd.f32 %v1693, %v1729
        %v1762 = vadd.f32 %v1694, %v1730
        %v1763 = vadd.f32 %v1695, %v1731
        %v1764 = vadd.f32 %v1696, %v1732
        %v1765 = vadd.f32 %v1697, %v1733
        %v1766 = vadd.f32 %v1698, %v1734
        %v1767 = vadd.f32 %v1699, %v1735
        %v1768 = vadd.f32 %v1700, %v1736
        %v1769 = vadd.f32 %v1701, %v1737
        %v1770 = vadd.f32 %v1702, %v1738
        %v1771 = vadd.f32 %v1703, %v1739
        %v1772 = vadd.f32 %v1704, %v1740
        %v1773 = vadd.f32 %v1705, %v1741
        %v1774 = vadd.f32 %v1706, %v1742
        %v1775 = vadd.f32 %v1707, %v1743
        %v1776 = vadd.f32 %v1708, %v1744
        %v1777 = vadd.f32 %v1709, %v1745
        %v1778 = vadd.f32 %v1710, %v1746
        %v1779 = vadd.f32 %v1711, %v1747
        %v1780 = vadd.f32 %v1712, %v1748
        %v1781 = vadd.f32 %v1713, %v1749
        %v1782 = vadd.f32 %v1714, %v1750
        %v1783 = vadd.f32 %v1715, %v1751
        %v1784 = vadd.f32 %v1716, %v1752
        %v1785 = vadd.f32 %v1717, %v1753
        %v1786 = vadd.f32 %v1718, %v1754
        %v1787 = vadd.f32 %v1719, %v1755
        %v1788 = vrot.slane %v318, 1
        %v1789 = vrot.slane %v320, 1
        %v1790 = vrot.slane %v322, 1
        %v1791 = vrot.slane %v324, 1
        %v1792 = vrot.slane %v326, 1
        %v1793 = vrot.slane %v328, 1
        %v1794 = vrot.slane %v330, 1
        %v1795 = vrot.slane %v332, 1
        %v1796 = vrot.slane %v334, 1
        %v1797 = vrot.slane %v336, 1
        %v1798 = vrot.slane %v338, 1
        %v1799 = vrot.slane %v340, 1
        %v1800 = vrot.slane %v342, 1
        %v1801 = vrot.slane %v344, 1
        %v1802 = vrot.slane %v346, 1
        %v1803 = vrot.slane %v348, 1
        %v1804 = vrot.slane %v319, 1
        %v1805 = vrot.slane %v321, 1
        %v1806 = vrot.slane %v323, 1
        %v1807 = vrot.slane %v325, 1
        %v1808 = vrot.slane %v327, 1
        %v1809 = vrot.slane %v329, 1
        %v1810 = vrot.slane %v331, 1
        %v1811 = vrot.slane %v333, 1
        %v1812 = vrot.slane %v335, 1
        %v1813 = vrot.slane %v337, 1
        %v1814 = vrot.slane %v339, 1
        %v1815 = vrot.slane %v341, 1
        %v1816 = vrot.slane %v343, 1
        %v1817 = vrot.slane %v345, 1
        %v1818 = vrot.slane %v347, 1
        %v1819 = vrot.slane %v349, 1
        %vm1820 = vcmp.lt.s32.totalorder %v1255, 7
        %v1821 = vsel %vm1820, %v1788, %v1804
        %v1822 = vsel %vm1820, %v1789, %v1805
        %v1823 = vsel %vm1820, %v1790, %v1806
        %v1824 = vsel %vm1820, %v1791, %v1807
        %v1825 = vsel %vm1820, %v1792, %v1808
        %v1826 = vsel %vm1820, %v1793, %v1809
        %v1827 = vsel %vm1820, %v1794, %v1810
        %v1828 = vsel %vm1820, %v1795, %v1811
        %v1829 = vsel %vm1820, %v1796, %v1812
        %v1830 = vsel %vm1820, %v1797, %v1813
        %v1831 = vsel %vm1820, %v1798, %v1814
        %v1832 = vsel %vm1820, %v1799, %v1815
        %v1833 = vsel %vm1820, %v1800, %v1816
        %v1834 = vsel %vm1820, %v1801, %v1817
        %v1835 = vsel %vm1820, %v1802, %v1818
        %v1836 = vsel %vm1820, %v1803, %v1819
        %v1837 = vsel %vm1820, %v1804, %v1788
        %v1838 = vsel %vm1820, %v1805, %v1789
        %v1839 = vsel %vm1820, %v1806, %v1790
        %v1840 = vsel %vm1820, %v1807, %v1791
        %v1841 = vsel %vm1820, %v1808, %v1792
        %v1842 = vsel %vm1820, %v1809, %v1793
        %v1843 = vsel %vm1820, %v1810, %v1794
        %v1844 = vsel %vm1820, %v1811, %v1795
        %v1845 = vsel %vm1820, %v1812, %v1796
        %v1846 = vsel %vm1820, %v1813, %v1797
        %v1847 = vsel %vm1820, %v1814, %v1798
        %v1848 = vsel %vm1820, %v1815, %v1799
        %v1849 = vsel %vm1820, %v1816, %v1800
        %v1850 = vsel %vm1820, %v1817, %v1801
        %v1851 = vsel %vm1820, %v1818, %v1802
        %v1852 = vsel %vm1820, %v1819, %v1803
        %vm1853 = vcmp.ge.s32.totalorder %v1255, 0
        %vm1854 = vcmp.ge.s32.totalorder %v1256, 0
        %vm1855 = vcmp.lt.s32.totalorder %v1255, 15
        %vm1856 = vcmp.lt.s32.totalorder %v1256, 15
        %vm1857 = vmand %vm1853, %vm1855
        %vm1858 = vmand %vm1854, %vm1856
        %v1859 = vsel %vm1857, 1, 0
        %v1860 = vsel %vm1858, 1, 0
        %v1861 = vcvt.s32.f32 %v1859
        %v1862 = vcvt.s32.f32 %v1860
        %v1863 = vlaneseq
        %v1864 = vshrl.u32 %v1863, 7
        %v1865 = vsub.s32 4, %v1864
        %v1866 = vrot.slane %v1253, %v1865
        %v1867 = vmul.f32 %v1866, %v1861
        %v1868 = vmul.f32 %v1866, %v1862
        %v1869 = vmul.f32 %v1867, %v1821
        %v1870 = vmul.f32 %v1868, %v1837
        %v1871 = vmul.f32 %v1867, %v1822
        %v1872 = vmul.f32 %v1868, %v1838
        %v1873 = vmul.f32 %v1867, %v1823
        %v1874 = vmul.f32 %v1868, %v1839
        %v1875 = vmul.f32 %v1867, %v1824
        %v1876 = vmul.f32 %v1868, %v1840
        %v1877 = vmul.f32 %v1867, %v1825
        %v1878 = vmul.f32 %v1868, %v1841
        %v1879 = vmul.f32 %v1867, %v1826
        %v1880 = vmul.f32 %v1868, %v1842
        %v1881 = vmul.f32 %v1867, %v1827
        %v1882 = vmul.f32 %v1868, %v1843
        %v1883 = vmul.f32 %v1867, %v1828
        %v1884 = vmul.f32 %v1868, %v1844
        %v1885 = vmul.f32 %v1867, %v1829
        %v1886 = vmul.f32 %v1868, %v1845
        %v1887 = vmul.f32 %v1867, %v1830
        %v1888 = vmul.f32 %v1868, %v1846
        %v1889 = vmul.f32 %v1867, %v1831
        %v1890 = vmul.f32 %v1868, %v1847
        %v1891 = vmul.f32 %v1867, %v1832
        %v1892 = vmul.f32 %v1868, %v1848
        %v1893 = vmul.f32 %v1867, %v1833
        %v1894 = vmul.f32 %v1868, %v1849
        %v1895 = vmul.f32 %v1867, %v1834
        %v1896 = vmul.f32 %v1868, %v1850
        %v1897 = vmul.f32 %v1867, %v1835
        %v1898 = vmul.f32 %v1868, %v1851
        %v1899 = vmul.f32 %v1867, %v1836
        %v1900 = vmul.f32 %v1868, %v1852
        %v1901 = vadd.f32 %v1756, %v1869
        %v1902 = vadd.f32 %v1757, %v1870
        %v1903 = vadd.f32 %v1758, %v1871
        %v1904 = vadd.f32 %v1759, %v1872
        %v1905 = vadd.f32 %v1760, %v1873
        %v1906 = vadd.f32 %v1761, %v1874
        %v1907 = vadd.f32 %v1762, %v1875
        %v1908 = vadd.f32 %v1763, %v1876
        %v1909 = vadd.f32 %v1764, %v1877
        %v1910 = vadd.f32 %v1765, %v1878
        %v1911 = vadd.f32 %v1766, %v1879
        %v1912 = vadd.f32 %v1767, %v1880
        %v1913 = vadd.f32 %v1768, %v1881
        %v1914 = vadd.f32 %v1769, %v1882
        %v1915 = vadd.f32 %v1770, %v1883
        %v1916 = vadd.f32 %v1771, %v1884
        %v1917 = vadd.f32 %v1772, %v1885
        %v1918 = vadd.f32 %v1773, %v1886
        %v1919 = vadd.f32 %v1774, %v1887
        %v1920 = vadd.f32 %v1775, %v1888
        %v1921 = vadd.f32 %v1776, %v1889
        %v1922 = vadd.f32 %v1777, %v1890
        %v1923 = vadd.f32 %v1778, %v1891
        %v1924 = vadd.f32 %v1779, %v1892
        %v1925 = vadd.f32 %v1780, %v1893
        %v1926 = vadd.f32 %v1781, %v1894
        %v1927 = vadd.f32 %v1782, %v1895
        %v1928 = vadd.f32 %v1783, %v1896
        %v1929 = vadd.f32 %v1784, %v1897
        %v1930 = vadd.f32 %v1785, %v1898
        %v1931 = vadd.f32 %v1786, %v1899
        %v1932 = vadd.f32 %v1787, %v1900
        %v1933 = vrot.slane %v318, 2
        %v1934 = vrot.slane %v320, 2
        %v1935 = vrot.slane %v322, 2
        %v1936 = vrot.slane %v324, 2
        %v1937 = vrot.slane %v326, 2
        %v1938 = vrot.slane %v328, 2
        %v1939 = vrot.slane %v330, 2
        %v1940 = vrot.slane %v332, 2
        %v1941 = vrot.slane %v334, 2
        %v1942 = vrot.slane %v336, 2
        %v1943 = vrot.slane %v338, 2
        %v1944 = vrot.slane %v340, 2
        %v1945 = vrot.slane %v342, 2
        %v1946 = vrot.slane %v344, 2
        %v1947 = vrot.slane %v346, 2
        %v1948 = vrot.slane %v348, 2
        %v1949 = vrot.slane %v319, 2
        %v1950 = vrot.slane %v321, 2
        %v1951 = vrot.slane %v323, 2
        %v1952 = vrot.slane %v325, 2
        %v1953 = vrot.slane %v327, 2
        %v1954 = vrot.slane %v329, 2
        %v1955 = vrot.slane %v331, 2
        %v1956 = vrot.slane %v333, 2
        %v1957 = vrot.slane %v335, 2
        %v1958 = vrot.slane %v337, 2
        %v1959 = vrot.slane %v339, 2
        %v1960 = vrot.slane %v341, 2
        %v1961 = vrot.slane %v343, 2
        %v1962 = vrot.slane %v345, 2
        %v1963 = vrot.slane %v347, 2
        %v1964 = vrot.slane %v349, 2
        %vm1965 = vcmp.lt.s32.totalorder %v1255, 6
        %v1966 = vsel %vm1965, %v1933, %v1949
        %v1967 = vsel %vm1965, %v1934, %v1950
        %v1968 = vsel %vm1965, %v1935, %v1951
        %v1969 = vsel %vm1965, %v1936, %v1952
        %v1970 = vsel %vm1965, %v1937, %v1953
        %v1971 = vsel %vm1965, %v1938, %v1954
        %v1972 = vsel %vm1965, %v1939, %v1955
        %v1973 = vsel %vm1965, %v1940, %v1956
        %v1974 = vsel %vm1965, %v1941, %v1957
        %v1975 = vsel %vm1965, %v1942, %v1958
        %v1976 = vsel %vm1965, %v1943, %v1959
        %v1977 = vsel %vm1965, %v1944, %v1960
        %v1978 = vsel %vm1965, %v1945, %v1961
        %v1979 = vsel %vm1965, %v1946, %v1962
        %v1980 = vsel %vm1965, %v1947, %v1963
        %v1981 = vsel %vm1965, %v1948, %v1964
        %v1982 = vsel %vm1965, %v1949, %v1933
        %v1983 = vsel %vm1965, %v1950, %v1934
        %v1984 = vsel %vm1965, %v1951, %v1935
        %v1985 = vsel %vm1965, %v1952, %v1936
        %v1986 = vsel %vm1965, %v1953, %v1937
        %v1987 = vsel %vm1965, %v1954, %v1938
        %v1988 = vsel %vm1965, %v1955, %v1939
        %v1989 = vsel %vm1965, %v1956, %v1940
        %v1990 = vsel %vm1965, %v1957, %v1941
        %v1991 = vsel %vm1965, %v1958, %v1942
        %v1992 = vsel %vm1965, %v1959, %v1943
        %v1993 = vsel %vm1965, %v1960, %v1944
        %v1994 = vsel %vm1965, %v1961, %v1945
        %v1995 = vsel %vm1965, %v1962, %v1946
        %v1996 = vsel %vm1965, %v1963, %v1947
        %v1997 = vsel %vm1965, %v1964, %v1948
        %vm1998 = vcmp.lt.s32.totalorder %v1255, 14
        %vm1999 = vcmp.lt.s32.totalorder %v1256, 14
        %vm2000 = vmand %vm1853, %vm1998
        %vm2001 = vmand %vm1854, %vm1999
        %v2002 = vsel %vm2000, 1, 0
        %v2003 = vsel %vm2001, 1, 0
        %v2004 = vcvt.s32.f32 %v2002
        %v2005 = vcvt.s32.f32 %v2003
        %v2006 = vlaneseq
        %v2007 = vshrl.u32 %v2006, 7
        %v2008 = vsub.s32 5, %v2007
        %v2009 = vrot.slane %v1253, %v2008
        %v2010 = vmul.f32 %v2009, %v2004
        %v2011 = vmul.f32 %v2009, %v2005
        %v2012 = vmul.f32 %v2010, %v1966
        %v2013 = vmul.f32 %v2011, %v1982
        %v2014 = vmul.f32 %v2010, %v1967
        %v2015 = vmul.f32 %v2011, %v1983
        %v2016 = vmul.f32 %v2010, %v1968
        %v2017 = vmul.f32 %v2011, %v1984
        %v2018 = vmul.f32 %v2010, %v1969
        %v2019 = vmul.f32 %v2011, %v1985
        %v2020 = vmul.f32 %v2010, %v1970
        %v2021 = vmul.f32 %v2011, %v1986
        %v2022 = vmul.f32 %v2010, %v1971
        %v2023 = vmul.f32 %v2011, %v1987
        %v2024 = vmul.f32 %v2010, %v1972
        %v2025 = vmul.f32 %v2011, %v1988
        %v2026 = vmul.f32 %v2010, %v1973
        %v2027 = vmul.f32 %v2011, %v1989
        %v2028 = vmul.f32 %v2010, %v1974
        %v2029 = vmul.f32 %v2011, %v1990
        %v2030 = vmul.f32 %v2010, %v1975
        %v2031 = vmul.f32 %v2011, %v1991
        %v2032 = vmul.f32 %v2010, %v1976
        %v2033 = vmul.f32 %v2011, %v1992
        %v2034 = vmul.f32 %v2010, %v1977
        %v2035 = vmul.f32 %v2011, %v1993
        %v2036 = vmul.f32 %v2010, %v1978
        %v2037 = vmul.f32 %v2011, %v1994
        %v2038 = vmul.f32 %v2010, %v1979
        %v2039 = vmul.f32 %v2011, %v1995
        %v2040 = vmul.f32 %v2010, %v1980
        %v2041 = vmul.f32 %v2011, %v1996
        %v2042 = vmul.f32 %v2010, %v1981
        %v2043 = vmul.f32 %v2011, %v1997
        %v2044 = vadd.f32 %v1901, %v2012
        %v2045 = vadd.f32 %v1902, %v2013
        %v2046 = vadd.f32 %v1903, %v2014
        %v2047 = vadd.f32 %v1904, %v2015
        %v2048 = vadd.f32 %v1905, %v2016
        %v2049 = vadd.f32 %v1906, %v2017
        %v2050 = vadd.f32 %v1907, %v2018
        %v2051 = vadd.f32 %v1908, %v2019
        %v2052 = vadd.f32 %v1909, %v2020
        %v2053 = vadd.f32 %v1910, %v2021
        %v2054 = vadd.f32 %v1911, %v2022
        %v2055 = vadd.f32 %v1912, %v2023
        %v2056 = vadd.f32 %v1913, %v2024
        %v2057 = vadd.f32 %v1914, %v2025
        %v2058 = vadd.f32 %v1915, %v2026
        %v2059 = vadd.f32 %v1916, %v2027
        %v2060 = vadd.f32 %v1917, %v2028
        %v2061 = vadd.f32 %v1918, %v2029
        %v2062 = vadd.f32 %v1919, %v2030
        %v2063 = vadd.f32 %v1920, %v2031
        %v2064 = vadd.f32 %v1921, %v2032
        %v2065 = vadd.f32 %v1922, %v2033
        %v2066 = vadd.f32 %v1923, %v2034
        %v2067 = vadd.f32 %v1924, %v2035
        %v2068 = vadd.f32 %v1925, %v2036
        %v2069 = vadd.f32 %v1926, %v2037
        %v2070 = vadd.f32 %v1927, %v2038
        %v2071 = vadd.f32 %v1928, %v2039
        %v2072 = vadd.f32 %v1929, %v2040
        %v2073 = vadd.f32 %v1930, %v2041
        %v2074 = vadd.f32 %v1931, %v2042
        %v2075 = vadd.f32 %v1932, %v2043
        %v2076 = vrot.slane %v318, 3
        %v2077 = vrot.slane %v320, 3
        %v2078 = vrot.slane %v322, 3
        %v2079 = vrot.slane %v324, 3
        %v2080 = vrot.slane %v326, 3
        %v2081 = vrot.slane %v328, 3
        %v2082 = vrot.slane %v330, 3
        %v2083 = vrot.slane %v332, 3
        %v2084 = vrot.slane %v334, 3
        %v2085 = vrot.slane %v336, 3
        %v2086 = vrot.slane %v338, 3
        %v2087 = vrot.slane %v340, 3
        %v2088 = vrot.slane %v342, 3
        %v2089 = vrot.slane %v344, 3
        %v2090 = vrot.slane %v346, 3
        %v2091 = vrot.slane %v348, 3
        %v2092 = vrot.slane %v319, 3
        %v2093 = vrot.slane %v321, 3
        %v2094 = vrot.slane %v323, 3
        %v2095 = vrot.slane %v325, 3
        %v2096 = vrot.slane %v327, 3
        %v2097 = vrot.slane %v329, 3
        %v2098 = vrot.slane %v331, 3
        %v2099 = vrot.slane %v333, 3
        %v2100 = vrot.slane %v335, 3
        %v2101 = vrot.slane %v337, 3
        %v2102 = vrot.slane %v339, 3
        %v2103 = vrot.slane %v341, 3
        %v2104 = vrot.slane %v343, 3
        %v2105 = vrot.slane %v345, 3
        %v2106 = vrot.slane %v347, 3
        %v2107 = vrot.slane %v349, 3
        %vm2108 = vcmp.lt.s32.totalorder %v1255, 5
        %v2109 = vsel %vm2108, %v2076, %v2092
        %v2110 = vsel %vm2108, %v2077, %v2093
        %v2111 = vsel %vm2108, %v2078, %v2094
        %v2112 = vsel %vm2108, %v2079, %v2095
        %v2113 = vsel %vm2108, %v2080, %v2096
        %v2114 = vsel %vm2108, %v2081, %v2097
        %v2115 = vsel %vm2108, %v2082, %v2098
        %v2116 = vsel %vm2108, %v2083, %v2099
        %v2117 = vsel %vm2108, %v2084, %v2100
        %v2118 = vsel %vm2108, %v2085, %v2101
        %v2119 = vsel %vm2108, %v2086, %v2102
        %v2120 = vsel %vm2108, %v2087, %v2103
        %v2121 = vsel %vm2108, %v2088, %v2104
        %v2122 = vsel %vm2108, %v2089, %v2105
        %v2123 = vsel %vm2108, %v2090, %v2106
        %v2124 = vsel %vm2108, %v2091, %v2107
        %v2125 = vsel %vm2108, %v2092, %v2076
        %v2126 = vsel %vm2108, %v2093, %v2077
        %v2127 = vsel %vm2108, %v2094, %v2078
        %v2128 = vsel %vm2108, %v2095, %v2079
        %v2129 = vsel %vm2108, %v2096, %v2080
        %v2130 = vsel %vm2108, %v2097, %v2081
        %v2131 = vsel %vm2108, %v2098, %v2082
        %v2132 = vsel %vm2108, %v2099, %v2083
        %v2133 = vsel %vm2108, %v2100, %v2084
        %v2134 = vsel %vm2108, %v2101, %v2085
        %v2135 = vsel %vm2108, %v2102, %v2086
        %v2136 = vsel %vm2108, %v2103, %v2087
        %v2137 = vsel %vm2108, %v2104, %v2088
        %v2138 = vsel %vm2108, %v2105, %v2089
        %v2139 = vsel %vm2108, %v2106, %v2090
        %v2140 = vsel %vm2108, %v2107, %v2091
        %vm2141 = vcmp.lt.s32.totalorder %v1255, 13
        %vm2142 = vcmp.lt.s32.totalorder %v1256, 13
        %vm2143 = vmand %vm1853, %vm2141
        %vm2144 = vmand %vm1854, %vm2142
        %v2145 = vsel %vm2143, 1, 0
        %v2146 = vsel %vm2144, 1, 0
        %v2147 = vcvt.s32.f32 %v2145
        %v2148 = vcvt.s32.f32 %v2146
        %v2149 = vlaneseq
        %v2150 = vshrl.u32 %v2149, 7
        %v2151 = vsub.s32 6, %v2150
        %v2152 = vrot.slane %v1253, %v2151
        %v2153 = vmul.f32 %v2152, %v2147
        %v2154 = vmul.f32 %v2152, %v2148
        %v2155 = vmul.f32 %v2153, %v2109
        %v2156 = vmul.f32 %v2154, %v2125
        %v2157 = vmul.f32 %v2153, %v2110
        %v2158 = vmul.f32 %v2154, %v2126
        %v2159 = vmul.f32 %v2153, %v2111
        %v2160 = vmul.f32 %v2154, %v2127
        %v2161 = vmul.f32 %v2153, %v2112
        %v2162 = vmul.f32 %v2154, %v2128
        %v2163 = vmul.f32 %v2153, %v2113
        %v2164 = vmul.f32 %v2154, %v2129
        %v2165 = vmul.f32 %v2153, %v2114
        %v2166 = vmul.f32 %v2154, %v2130
        %v2167 = vmul.f32 %v2153, %v2115
        %v2168 = vmul.f32 %v2154, %v2131
        %v2169 = vmul.f32 %v2153, %v2116
        %v2170 = vmul.f32 %v2154, %v2132
        %v2171 = vmul.f32 %v2153, %v2117
        %v2172 = vmul.f32 %v2154, %v2133
        %v2173 = vmul.f32 %v2153, %v2118
        %v2174 = vmul.f32 %v2154, %v2134
        %v2175 = vmul.f32 %v2153, %v2119
        %v2176 = vmul.f32 %v2154, %v2135
        %v2177 = vmul.f32 %v2153, %v2120
        %v2178 = vmul.f32 %v2154, %v2136
        %v2179 = vmul.f32 %v2153, %v2121
        %v2180 = vmul.f32 %v2154, %v2137
        %v2181 = vmul.f32 %v2153, %v2122
        %v2182 = vmul.f32 %v2154, %v2138
        %v2183 = vmul.f32 %v2153, %v2123
        %v2184 = vmul.f32 %v2154, %v2139
        %v2185 = vmul.f32 %v2153, %v2124
        %v2186 = vmul.f32 %v2154, %v2140
        %v2187 = vadd.f32 %v2044, %v2155
        %v2188 = vadd.f32 %v2045, %v2156
        %v2189 = vadd.f32 %v2046, %v2157
        %v2190 = vadd.f32 %v2047, %v2158
        %v2191 = vadd.f32 %v2048, %v2159
        %v2192 = vadd.f32 %v2049, %v2160
        %v2193 = vadd.f32 %v2050, %v2161
        %v2194 = vadd.f32 %v2051, %v2162
        %v2195 = vadd.f32 %v2052, %v2163
        %v2196 = vadd.f32 %v2053, %v2164
        %v2197 = vadd.f32 %v2054, %v2165
        %v2198 = vadd.f32 %v2055, %v2166
        %v2199 = vadd.f32 %v2056, %v2167
        %v2200 = vadd.f32 %v2057, %v2168
        %v2201 = vadd.f32 %v2058, %v2169
        %v2202 = vadd.f32 %v2059, %v2170
        %v2203 = vadd.f32 %v2060, %v2171
        %v2204 = vadd.f32 %v2061, %v2172
        %v2205 = vadd.f32 %v2062, %v2173
        %v2206 = vadd.f32 %v2063, %v2174
        %v2207 = vadd.f32 %v2064, %v2175
        %v2208 = vadd.f32 %v2065, %v2176
        %v2209 = vadd.f32 %v2066, %v2177
        %v2210 = vadd.f32 %v2067, %v2178
        %v2211 = vadd.f32 %v2068, %v2179
        %v2212 = vadd.f32 %v2069, %v2180
        %v2213 = vadd.f32 %v2070, %v2181
        %v2214 = vadd.f32 %v2071, %v2182
        %v2215 = vadd.f32 %v2072, %v2183
        %v2216 = vadd.f32 %v2073, %v2184
        %v2217 = vadd.f32 %v2074, %v2185
        %v2218 = vadd.f32 %v2075, %v2186
        %2219 = vst.msk [vmem:[#allocation3] sm:$0xff] %vm428, %v2187
        %2220 = vst.msk [vmem:[#allocation3 + $0x8] sm:$0xff] %vm428, %v2188
        %2221 = vst.msk [vmem:[#allocation3 + $0x10] sm:$0xff] %vm428, %v2189
        %2222 = vst.msk [vmem:[#allocation3 + $0x18] sm:$0xff] %vm428, %v2190
        %2223 = vst.msk [vmem:[#allocation3 + $0x20] sm:$0xff] %vm428, %v2191
        %2224 = vst.msk [vmem:[#allocation3 + $0x28] sm:$0xff] %vm428, %v2192
        %2225 = vst.msk [vmem:[#allocation3 + $0x30] sm:$0xff] %vm428, %v2193
        %2226 = vst.msk [vmem:[#allocation3 + $0x38] sm:$0xff] %vm428, %v2194
        %2227 = vst.msk [vmem:[#allocation3 + $0x40] sm:$0xff] %vm428, %v2195
        %2228 = vst.msk [vmem:[#allocation3 + $0x48] sm:$0xff] %vm428, %v2196
        %2229 = vst.msk [vmem:[#allocation3 + $0x50] sm:$0xff] %vm428, %v2197
        %2230 = vst.msk [vmem:[#allocation3 + $0x58] sm:$0xff] %vm428, %v2198
        %2231 = vst.msk [vmem:[#allocation3 + $0x60] sm:$0xff] %vm428, %v2199
        %2232 = vst.msk [vmem:[#allocation3 + $0x68] sm:$0xff] %vm428, %v2200
        %2233 = vst.msk [vmem:[#allocation3 + $0x70] sm:$0xff] %vm428, %v2201
        %2234 = vst.msk [vmem:[#allocation3 + $0x78] sm:$0xff] %vm428, %v2202
        %2235 = vst.msk [vmem:[#allocation3 + $0x80] sm:$0xff] %vm428, %v2203
        %2236 = vst.msk [vmem:[#allocation3 + $0x88] sm:$0xff] %vm428, %v2204
        %2237 = vst.msk [vmem:[#allocation3 + $0x90] sm:$0xff] %vm428, %v2205
        %2238 = vst.msk [vmem:[#allocation3 + $0x98] sm:$0xff] %vm428, %v2206
        %2239 = vst.msk [vmem:[#allocation3 + $0xa0] sm:$0xff] %vm428, %v2207
        %2240 = vst.msk [vmem:[#allocation3 + $0xa8] sm:$0xff] %vm428, %v2208
        %2241 = vst.msk [vmem:[#allocation3 + $0xb0] sm:$0xff] %vm428, %v2209
        %2242 = vst.msk [vmem:[#allocation3 + $0xb8] sm:$0xff] %vm428, %v2210
        %2243 = vst.msk [vmem:[#allocation3 + $0xc0] sm:$0xff] %vm428, %v2211
        %2244 = vst.msk [vmem:[#allocation3 + $0xc8] sm:$0xff] %vm428, %v2212
        %2245 = vst.msk [vmem:[#allocation3 + $0xd0] sm:$0xff] %vm428, %v2213
        %2246 = vst.msk [vmem:[#allocation3 + $0xd8] sm:$0xff] %vm428, %v2214
        %2247 = vst.msk [vmem:[#allocation3 + $0xe0] sm:$0xff] %vm428, %v2215
        %2248 = vst.msk [vmem:[#allocation3 + $0xe8] sm:$0xff] %vm428, %v2216
        %2249 = vst.msk [vmem:[#allocation3 + $0xf0] sm:$0xff] %vm428, %v2217
        %2250 = vst.msk [vmem:[#allocation3 + $0xf8] sm:$0xff] %vm428, %v2218
      $region48: #{tpu_custom_call.1} parent=39 // pred_fallthru
        _
      %v2251 = vld [vmem:[#allocation3] sm:$0xff]
      %v2252 = vld [vmem:[#allocation3 + $0x8] sm:$0xff]
      %v2253 = vld [vmem:[#allocation3 + $0x10] sm:$0xff]
      %v2254 = vld [vmem:[#allocation3 + $0x18] sm:$0xff]
      %v2255 = vld [vmem:[#allocation3 + $0x20] sm:$0xff]
      %v2256 = vld [vmem:[#allocation3 + $0x28] sm:$0xff]
      %v2257 = vld [vmem:[#allocation3 + $0x30] sm:$0xff]
      %v2258 = vld [vmem:[#allocation3 + $0x38] sm:$0xff]
      %v2259 = vld [vmem:[#allocation3 + $0x40] sm:$0xff]
      %v2260 = vld [vmem:[#allocation3 + $0x48] sm:$0xff]
      %v2261 = vld [vmem:[#allocation3 + $0x50] sm:$0xff]
      %v2262 = vld [vmem:[#allocation3 + $0x58] sm:$0xff]
      %v2263 = vld [vmem:[#allocation3 + $0x60] sm:$0xff]
      %v2264 = vld [vmem:[#allocation3 + $0x68] sm:$0xff]
      %v2265 = vld [vmem:[#allocation3 + $0x70] sm:$0xff]
      %v2266 = vld [vmem:[#allocation3 + $0x78] sm:$0xff]
      %v2267 = vld [vmem:[#allocation3 + $0x80] sm:$0xff]
      %v2268 = vld [vmem:[#allocation3 + $0x88] sm:$0xff]
      %v2269 = vld [vmem:[#allocation3 + $0x90] sm:$0xff]
      %v2270 = vld [vmem:[#allocation3 + $0x98] sm:$0xff]
      %v2271 = vld [vmem:[#allocation3 + $0xa0] sm:$0xff]
      %v2272 = vld [vmem:[#allocation3 + $0xa8] sm:$0xff]
      %v2273 = vld [vmem:[#allocation3 + $0xb0] sm:$0xff]
      %v2274 = vld [vmem:[#allocation3 + $0xb8] sm:$0xff]
      %v2275 = vld [vmem:[#allocation3 + $0xc0] sm:$0xff]
      %v2276 = vld [vmem:[#allocation3 + $0xc8] sm:$0xff]
      %v2277 = vld [vmem:[#allocation3 + $0xd0] sm:$0xff]
      %v2278 = vld [vmem:[#allocation3 + $0xd8] sm:$0xff]
      %v2279 = vld [vmem:[#allocation3 + $0xe0] sm:$0xff]
      %v2280 = vld [vmem:[#allocation3 + $0xe8] sm:$0xff]
      %v2281 = vld [vmem:[#allocation3 + $0xf0] sm:$0xff]
      %v2282 = vld [vmem:[#allocation3 + $0xf8] sm:$0xff]
      %2283 = vst.msk [vmem:[%s317] sm:$0xff] %vm428, %v2251
      %2284 = vst.msk [vmem:[%s317 + $0x8] sm:$0xff] %vm428, %v2252
      %2285 = vst.msk [vmem:[%s317 + $0x10] sm:$0xff] %vm428, %v2253
      %2286 = vst.msk [vmem:[%s317 + $0x18] sm:$0xff] %vm428, %v2254
      %2287 = vst.msk [vmem:[%s317 + $0x20] sm:$0xff] %vm428, %v2255
      %2288 = vst.msk [vmem:[%s317 + $0x28] sm:$0xff] %vm428, %v2256
      %2289 = vst.msk [vmem:[%s317 + $0x30] sm:$0xff] %vm428, %v2257
      %2290 = vst.msk [vmem:[%s317 + $0x38] sm:$0xff] %vm428, %v2258
      %2291 = vst.msk [vmem:[%s317 + $0x40] sm:$0xff] %vm428, %v2259
      %2292 = vst.msk [vmem:[%s317 + $0x48] sm:$0xff] %vm428, %v2260
      %2293 = vst.msk [vmem:[%s317 + $0x50] sm:$0xff] %vm428, %v2261
      %2294 = vst.msk [vmem:[%s317 + $0x58] sm:$0xff] %vm428, %v2262
      %2295 = vst.msk [vmem:[%s317 + $0x60] sm:$0xff] %vm428, %v2263
      %2296 = vst.msk [vmem:[%s317 + $0x68] sm:$0xff] %vm428, %v2264
      %2297 = vst.msk [vmem:[%s317 + $0x70] sm:$0xff] %vm428, %v2265
      %2298 = vst.msk [vmem:[%s317 + $0x78] sm:$0xff] %vm428, %v2266
      %2299 = vst.msk [vmem:[%s317 + $0x80] sm:$0xff] %vm428, %v2267
      %2300 = vst.msk [vmem:[%s317 + $0x88] sm:$0xff] %vm428, %v2268
      %2301 = vst.msk [vmem:[%s317 + $0x90] sm:$0xff] %vm428, %v2269
      %2302 = vst.msk [vmem:[%s317 + $0x98] sm:$0xff] %vm428, %v2270
      %2303 = vst.msk [vmem:[%s317 + $0xa0] sm:$0xff] %vm428, %v2271
      %2304 = vst.msk [vmem:[%s317 + $0xa8] sm:$0xff] %vm428, %v2272
      %2305 = vst.msk [vmem:[%s317 + $0xb0] sm:$0xff] %vm428, %v2273
      %2306 = vst.msk [vmem:[%s317 + $0xb8] sm:$0xff] %vm428, %v2274
      %2307 = vst.msk [vmem:[%s317 + $0xc0] sm:$0xff] %vm428, %v2275
      %2308 = vst.msk [vmem:[%s317 + $0xc8] sm:$0xff] %vm428, %v2276
      %2309 = vst.msk [vmem:[%s317 + $0xd0] sm:$0xff] %vm428, %v2277
      %2310 = vst.msk [vmem:[%s317 + $0xd8] sm:$0xff] %vm428, %v2278
      %2311 = vst.msk [vmem:[%s317 + $0xe0] sm:$0xff] %vm428, %v2279
      %2312 = vst.msk [vmem:[%s317 + $0xe8] sm:$0xff] %vm428, %v2280
      %2313 = vst.msk [vmem:[%s317 + $0xf0] sm:$0xff] %vm428, %v2281
      %2314 = vst.msk [vmem:[%s317 + $0xf8] sm:$0xff] %vm428, %v2282
      %p2315 = scmp.lt.s32.totalorder %s20, 1
      %s2316 = scalar_select %p2315, %s20, 1
      %p2317 = scmp.lt.s32.totalorder %s21, 0
      %s2318 = scalar_select %p2317, %s21, 0
      %s2319 = smul.addr %s2316, 32
      %s2320 = sadd.s32 %s2318, %s2319
      %s2321 = smul.addr %s2320, 8
      %s2322 = scalar_lea.vmem %s5, %s2321
      // Predicated region
      $region49: #{tpu_custom_call.1} parent=39 // pred_check
        %p2323 = pneg %p180
      $region50: #{tpu_custom_call.1} parent=39 // pred_check_branch
        %2325 = sbr.rel (%p2323) target = $region52
      $region51: #{tpu_custom_call.1} parent=39 // pred_region
        _
      $region52: #{tpu_custom_call.1} parent=39 // pred_fallthru
        _
    $region40: #{tpu_custom_call.1} parent=5 // pred_fallthru
      _
    %p2326 = scmp.le.s32.totalorder 2, %s11
    // Predicated region
    $region53: #{tpu_custom_call.1} parent=5 // pred_check
      %p2327 = pneg %p2326
    $region54: #{tpu_custom_call.1} parent=5 // pred_check_branch
      %2329 = sbr.rel (%p2327) target = $region56
    $region55: #{tpu_custom_call.1} parent=5 // pred_region
      %s2330 = ssub.s32 %s11, 2
      // Predicated region
      $region57: #{tpu_custom_call.1} parent=55 // pred_check
        %p2331 = pneg %p186
      $region58: #{tpu_custom_call.1} parent=55 // pred_check_branch
        %2333 = sbr.rel (%p2331) target = $region60
      $region59: #{tpu_custom_call.1} parent=55 // pred_region
        %p2334 = scmp.lt.s32.totalorder %s22, 1
        %s2335 = scalar_select %p2334, %s22, 1
        %p2336 = scmp.lt.s32.totalorder %s23, 0
        %s2337 = scalar_select %p2336, %s23, 0
        %s2338 = smul.addr %s2335, 32
        %s2339 = sadd.s32 %s2337, %s2338
        %s2340 = smul.addr %s2339, 8
        %s2341 = scalar_lea.vmem %s5, %s2340
      $region60: #{tpu_custom_call.1} parent=55 // pred_fallthru
        _
    $region56: #{tpu_custom_call.1} parent=5 // pred_fallthru
      _
  $region6: #{tpu_custom_call.1} parent=0 // loop_footer
    %s15 = sadd.s32 1, %s11
  $region7: #{tpu_custom_call.1} parent=0 // loop_footer_branch
    %10 = sbr.rel target = $region3
  $region8: #{tpu_custom_call.1} parent=0 // loop_exit
    _

</llo_original>
